<compile_context>
chip_gen: v6e
topology: v6e:2x2x1
jax: 0.10.0
libtpu: 0.0.40
codegen_flags: <defaults>
</compile_context>

<pallas_src>
import functools
import math

import jax
import jax.numpy as jnp
from jax import lax
from jax.experimental import pallas as pl
from jax.experimental.pallas import tpu as pltpu

_MASK_VALUE = -1e30  # finite large-negative; avoids NaNs if a row were fully masked


def _mha_kernel(x_ref, w_ref, o_ref, *, scale, n_head, head_size, mxu_dtype):
    # x_ref: (1, T, C)  current batch element
    # w_ref: (C, 3*H*hs) fused [Wq_all | Wk_all | Wv_all]
    # o_ref: (1, T, H*hs) lane-dense output slab for this batch element
    T = x_ref.shape[1]
    H, hs = n_head, head_size
    N = H * hs

    x = x_ref[0]                       # (T, C)
    w = w_ref[...]                     # (C, 3N)
    if mxu_dtype is not None:
        x = x.astype(mxu_dtype)
        w = w.astype(mxu_dtype)

    # One fused projection matmul for all heads and Q/K/V (f32 accumulation).
    qkv = jnp.dot(x, w, preferred_element_type=jnp.float32)     # (T, 3N) f32

    q = qkv[:, 0 * N:1 * N].reshape(T, H, hs)                   # (T, H, hs)
    k = qkv[:, 1 * N:2 * N].reshape(T, H, hs)
    v = qkv[:, 2 * N:3 * N].reshape(T, H, hs)

    if mxu_dtype is not None:
        qm, km = q.astype(mxu_dtype), k.astype(mxu_dtype)
    else:
        qm, km = q, k

    # Batched over heads, contracting head_size; no explicit transpose of K.
    s = jnp.einsum('thd,shd->hts', qm, km,
                   preferred_element_type=jnp.float32) * scale  # (H, T, T)

    # Causal mask, built once per grid step (shared by all heads).
    row = lax.broadcasted_iota(jnp.int32, (T, T), 0)
    col = lax.broadcasted_iota(jnp.int32, (T, T), 1)
    causal = (col <= row)[None, :, :]
    s = jnp.where(causal, s, jnp.float32(_MASK_VALUE))

    # Softmax over keys (f32 elementwise math; reciprocal on the EUP).
    s = s - jnp.max(s, axis=-1, keepdims=True)
    p = jnp.exp(s)
    p = p * pl.reciprocal(jnp.sum(p, axis=-1, keepdims=True), approx=True)

    if mxu_dtype is not None:
        pm, vm = p.astype(mxu_dtype), v.astype(mxu_dtype)
    else:
        pm, vm = p, v

    out = jnp.einsum('hts,shd->thd', pm, vm,
                     preferred_element_type=jnp.float32)        # (T, H, hs)

    # Heads laid out contiguously along lanes == torch.cat(..., dim=-1) order.
    o_ref[0] = out.reshape(T, N).astype(o_ref.dtype)


def multi_head_attention(x, wq, wk, wv, *, mxu_dtype=None):
    """x: (B, T, C); wq/wk/wv: (H, C, hs) per-head projection weights.

    Returns (B, T, H*hs), matching torch.cat([h(x) for h in heads], dim=-1).
    """
    B, T, C = x.shape
    H, _, hs = wq.shape
    N = H * hs
    scale = 1.0 / math.sqrt(C)          # reference scales by 1/sqrt(n_embed)

    # Wrapper-side layout plumbing (one-time, on weights only):
    # (H, C, hs) -> (C, H*hs), then concat Q|K|V along lanes -> (C, 3*H*hs).
    def fuse(w):
        return jnp.transpose(w, (1, 0, 2)).reshape(C, N)

    w_all = jnp.concatenate([fuse(wq), fuse(wk), fuse(wv)], axis=-1)  # (C, 3N)

    kernel = functools.partial(
        _mha_kernel, scale=scale, n_head=H, head_size=hs, mxu_dtype=mxu_dtype)

    return pl.pallas_call(
        kernel,
        out_shape=jax.ShapeDtypeStruct((B, T, N), x.dtype),
        grid_spec=pltpu.PrefetchScalarGridSpec(
            num_scalar_prefetch=0,
            grid=(B,),
            in_specs=[
                pl.BlockSpec((1, T, C), lambda b: (b, 0, 0)),   # x (per batch)
                pl.BlockSpec((C, 3 * N), lambda b: (0, 0)),     # fused weights
            ],
            out_specs=pl.BlockSpec((1, T, N), lambda b: (b, 0, 0)),
        ),
        compiler_params=pltpu.CompilerParams(
            dimension_semantics=("parallel",)),
    )(x, w_all)


def _reference(x, wq, wk, wv):
    """Plain-JAX reference mirroring the PyTorch module, for verification."""
    B, T, C = x.shape
    H, _, hs = wq.shape
    scale = 1.0 / math.sqrt(C)
    mask = jnp.tril(jnp.ones((T, T), dtype=bool))
    outs = []
    for h in range(H):
        q = x @ wq[h]
        k = x @ wk[h]
        v = x @ wv[h]
        s = (q @ jnp.swapaxes(k, -1, -2)) * scale
        s = jnp.where(mask, s, -jnp.inf)
        p = jax.nn.softmax(s, axis=-1)
        outs.append(p @ v)
    return jnp.concatenate(outs, axis=-1)


if __name__ == "__main__":
    # Small, deterministic config consistent with the module.
    n_head = 4
    n_embed = 32
    context_length = 16
    head_size = n_embed // n_head       # 8
    B, T = 2, 8                         # T <= context_length

    key = jax.random.PRNGKey(0)
    kx, kq, kk, kv = jax.random.split(key, 4)

    x = jax.random.normal(kx, (B, T, n_embed), dtype=jnp.float32)
    # Per-head projection weights (H, C, hs): equivalent to stacking
    # nn.Linear(n_embed, head_size, bias=False).weight.T over heads.
    wq = jax.random.normal(kq, (n_head, n_embed, head_size), jnp.float32) * 0.1
    wk = jax.random.normal(kk, (n_head, n_embed, head_size), jnp.float32) * 0.1
    wv = jax.random.normal(kv, (n_head, n_embed, head_size), jnp.float32) * 0.1

    ref = _reference(x, wq, wk, wv)

    # f32 path (dtype-faithful to the PyTorch module).
    out = multi_head_attention(x, wq, wk, wv)
    jax.block_until_ready(out)
    assert out.shape == (B, T, n_embed), out.shape
    assert jnp.allclose(out, ref, atol=5e-3, rtol=5e-3), "f32 mismatch vs reference"

    # bf16-MXU-input path (v6e/v7x high-throughput mode), f32 accumulation.
    out_bf16 = multi_head_attention(x, wq, wk, wv, mxu_dtype=jnp.bfloat16)
    jax.block_until_ready(out_bf16)
    assert out_bf16.shape == (B, T, n_embed), out_bf16.shape
    assert jnp.allclose(out_bf16, ref, atol=5e-2, rtol=5e-2), "bf16 mismatch vs reference"

    print("KERNEL_OK")
</pallas_src>

<mosaic_0001>
module attributes {stable_mosaic.version = 11 : i64} {
  func.func @_mha_kernel(%arg0: i32, %arg1: memref<1x8x32xf32, #tpu.memory_space<vmem>>, %arg2: memref<32x96xf32, #tpu.memory_space<vmem>>, %arg3: memref<1x8x32xf32, #tpu.memory_space<vmem>>) attributes {dimension_semantics = [#tpu.dimension_semantics<parallel>], iteration_bounds = array<i64: 2>, scalar_prefetch = 0 : i64, scratch_operands = 0 : i64, tpu.core_type = #tpu.core_type<tc>, window_params = [{transform_indices = @transform_0, window_bounds = array<i64: 1, 8, 32>}, {pipeline_mode = #tpu.pipeline_mode<synchronous>, transform_indices = @transform_1, window_bounds = array<i64: 32, 96>}, {transform_indices = @transform_2, window_bounds = array<i64: 1, 8, 32>}]} {
    %c0 = arith.constant 0 : index
    %c0_0 = arith.constant 0 : index
    %c0_1 = arith.constant 0 : index
    %0 = vector.load %arg1[%c0, %c0_0, %c0_1] : memref<1x8x32xf32, #tpu.memory_space<vmem>>, vector<1x8x32xf32>
    %1 = vector.shape_cast %0 : vector<1x8x32xf32> to vector<8x32xf32>
    %c0_2 = arith.constant 0 : index
    %c0_3 = arith.constant 0 : index
    %2 = vector.load %arg2[%c0_2, %c0_3] : memref<32x96xf32, #tpu.memory_space<vmem>>, vector<32x96xf32>
    %cst = arith.constant dense<0.000000e+00> : vector<8x96xf32>
    %3 = tpu.matmul %1, %2, %cst {dimension_numbers = #tpu.dot_dimension_numbers<[1], [0], [0], [1], [0, 0, 1, 1], [], []>} : vector<8x32xf32>, vector<32x96xf32>, vector<8x96xf32> -> vector<8x96xf32>
    %4 = vector.extract_strided_slice %3 {offsets = [0, 0], sizes = [8, 32], strides = [1, 1]} : vector<8x96xf32> to vector<8x32xf32>
    %5 = vector.shape_cast %4 : vector<8x32xf32> to vector<8x4x8xf32>
    %6 = vector.extract_strided_slice %3 {offsets = [0, 32], sizes = [8, 32], strides = [1, 1]} : vector<8x96xf32> to vector<8x32xf32>
    %7 = vector.shape_cast %6 : vector<8x32xf32> to vector<8x4x8xf32>
    %8 = vector.extract_strided_slice %3 {offsets = [0, 64], sizes = [8, 32], strides = [1, 1]} : vector<8x96xf32> to vector<8x32xf32>
    %9 = vector.shape_cast %8 : vector<8x32xf32> to vector<8x4x8xf32>
    "tpu.trace_start"() <{level = 10 : i32, message = "thd,shd->hts"}> : () -> ()
    %cst_4 = arith.constant dense<0.000000e+00> : vector<4x8x8xf32>
    %10 = tpu.matmul %5, %7, %cst_4 {dimension_numbers = #tpu.dot_dimension_numbers<[2], [2], [0], [0], [0, 1, 0, 0, 1, 0], [1], [1]>} : vector<8x4x8xf32>, vector<8x4x8xf32>, vector<4x8x8xf32> -> vector<4x8x8xf32>
    "tpu.trace_stop"() : () -> ()
    %cst_5 = arith.constant 0.176776692 : f32
    %11 = vector.broadcast %cst_5 : f32 to vector<4x8x8xf32>
    %12 = arith.mulf %10, %11 : vector<4x8x8xf32>
    %13 = tpu.iota {dimensions = array<i32: 0>} : vector<8x8xi32>
    %14 = tpu.iota {dimensions = array<i32: 1>} : vector<8x8xi32>
    %15 = arith.cmpi sle, %14, %13 : vector<8x8xi32>
    %16 = vector.shape_cast %15 : vector<8x8xi1> to vector<1x8x8xi1>
    %cst_6 = arith.constant -1.000000e+30 : f32
    %17 = vector.shape_cast %16 : vector<1x8x8xi1> to vector<1x8x8xi1>
    %18 = vector.broadcast %17 : vector<1x8x8xi1> to vector<4x8x8xi1>
    %19 = vector.broadcast %cst_6 : f32 to vector<4x8x8xf32>
    %20 = arith.select %18, %12, %19 : vector<4x8x8xi1>, vector<4x8x8xf32>
    %cst_7 = arith.constant dense<0xFF800000> : vector<4x8xf32>
    %21 = vector.multi_reduction <maximumf>, %20, %cst_7 [2] : vector<4x8x8xf32> to vector<4x8xf32>
    %22 = vector.shape_cast %21 : vector<4x8xf32> to vector<4x8x1xf32>
    %23 = vector.broadcast %22 : vector<4x8x1xf32> to vector<4x8x8xf32>
    %24 = arith.subf %20, %23 : vector<4x8x8xf32>
    %25 = math.exp %24 : vector<4x8x8xf32>
    %cst_8 = arith.constant dense<0.000000e+00> : vector<4x8xf32>
    %26 = vector.multi_reduction <add>, %25, %cst_8 [2] : vector<4x8x8xf32> to vector<4x8xf32>
    %27 = vector.shape_cast %26 : vector<4x8xf32> to vector<4x8x1xf32>
    %28 = tpu.reciprocal %27 {approx = true} : vector<4x8x1xf32> -> vector<4x8x1xf32>
    %29 = vector.broadcast %28 : vector<4x8x1xf32> to vector<4x8x8xf32>
    %30 = arith.mulf %25, %29 : vector<4x8x8xf32>
    "tpu.trace_start"() <{level = 10 : i32, message = "hts,shd->thd"}> : () -> ()
    %cst_9 = arith.constant dense<0.000000e+00> : vector<4x8x8xf32>
    %31 = tpu.matmul %9, %30, %cst_9 {dimension_numbers = #tpu.dot_dimension_numbers<[0], [2], [2], [1], [0, 1, 0, 2, 1, 1], [1], [0]>} : vector<8x4x8xf32>, vector<4x8x8xf32>, vector<4x8x8xf32> -> vector<4x8x8xf32>
    %32 = tpu.transpose %31, [2, 0, 1] : vector<4x8x8xf32> -> vector<8x4x8xf32>
    "tpu.trace_stop"() : () -> ()
    %33 = vector.shape_cast %32 : vector<8x4x8xf32> to vector<8x32xf32>
    %c0_10 = arith.constant 0 : index
    %c0_11 = arith.constant 0 : index
    %c0_12 = arith.constant 0 : index
    %34 = vector.load %arg3[%c0_10, %c0_11, %c0_12] : memref<1x8x32xf32, #tpu.memory_space<vmem>>, vector<1x8x32xf32>
    %35 = vector.shape_cast %34 : vector<1x8x32xf32> to vector<8x32xf32>
    %36 = vector.shape_cast %33 : vector<8x32xf32> to vector<1x8x32xf32>
    tpu.vector_store %arg3[%c0_10, %c0_11, %c0_12], %36 {strides = array<i32>} : memref<1x8x32xf32, #tpu.memory_space<vmem>>, vector<1x8x32xf32>,
    return
  }
  func.func @transform_0(%arg0: i32) -> (i32, i32, i32) {
    %c0_i32 = arith.constant 0 : i32
    %c0_i32_0 = arith.constant 0 : i32
    %c0_i32_1 = arith.constant 0 : i32
    return %arg0, %c0_i32, %c0_i32_0 : i32, i32, i32
  }
  func.func @transform_1(%arg0: i32) -> (i32, i32) {
    %c0_i32 = arith.constant 0 : i32
    %c0_i32_0 = arith.constant 0 : i32
    %c0_i32_1 = arith.constant 0 : i32
    return %c0_i32, %c0_i32_0 : i32, i32
  }
  func.func @transform_2(%arg0: i32) -> (i32, i32, i32) {
    %c0_i32 = arith.constant 0 : i32
    %c0_i32_0 = arith.constant 0 : i32
    %c0_i32_1 = arith.constant 0 : i32
    return %arg0, %c0_i32, %c0_i32_0 : i32, i32, i32
  }
}

</mosaic_0001>

<llo_original>
// kernel: tpu_custom_call.1
$region0: #{tpu_custom_call.1}
  #allocation0 [shape = 'u32[]', space=smem, size = 0x4, offset = 0x4, fixed_abs, tag = 'smem constant byte address 0x4 - core index']
  #allocation1 [shape = 'u32[144,128]{1,0:T(1,128)}', space=vmem, size = 0x12000, scoped, tag = 'internal scratch']
  %s0 = inlined_call_operand.hbm [shape: f32[2,8,32], index: 0, kind: input, shape index: {}]
  %s1 = inlined_call_operand.hbm [shape: f32[32,96], index: 1, kind: input, shape index: {}]
  %s2 = inlined_call_operand.hbm [shape: f32[2,8,32], index: 2, kind: output, shape index: {}]
  %s3 = sld [smem:[#allocation0]]
  $region49: #{tpu_custom_call.1} parent=0
    _
  %s5 = ssub.s32 1, %s3
  %s6 = scalar_select 0, %s5, %s3
  $region1: #{tpu_custom_call.1} parent=0
    #allocation2 [shape = 'u8[8192]{0}', space=vmem, size = 0x2000, scoped, tag = 'input window, operand 0']
    #allocation3 [shape = 's32[2]{0}', space=sflag, size = 0x8, scoped, tag = 'scoped memory for tpu_custom_call.1']
    #allocation4 [shape = 's32[2]{0}', space=sflag, size = 0x8, scoped, tag = 'scoped memory for tpu_custom_call.1']
    #allocation5 [shape = 'u8[16384]{0}', space=vmem, size = 0x4000, scoped, tag = 'input window, operand 1, single buffered']
    #allocation6 [shape = 's32[1]{0}', space=sflag, size = 0x4, scoped, tag = 'scoped memory for tpu_custom_call.1']
    #allocation7 [shape = 'u8[8192]{0}', space=vmem, size = 0x2000, scoped, tag = 'output window, operand 0']
    %7 = vsyncpa [#allocation3], 0
    %s8 = scalar_lea.sflag [#allocation3], 1
    %9 = vsyncpa %s8, 0
    %10 = vsyncpa [#allocation6], 0
    %11 = vsyncpa [#allocation4], 0
    %s12 = scalar_lea.sflag [#allocation4], 1
    %13 = vsyncpa %s12, 0
    loop: start=0, step=1, limit=4
    $region2: #{tpu_custom_call.1} parent=1 // loop_pre_header
      _
    $region3: #{tpu_custom_call.1} parent=1 // loop_header
      %s15 = sphi 0, %s19
      %p16 = scmp.ge.s32.totalorder %s15, 4
      %s25 = sphi 0, %s27
      %s28 = sphi 0, %s25
      %s29 = sphi 0, %s28
      %s45 = sphi 0, %s29
      %s49 = sphi 0, %s49
      %s51 = sphi 0, %s49
      %s52 = sphi 0, %s51
      %s66 = sphi 0, %s52
      %s72 = sphi 0, %s74
      %s75 = sphi 0, %s72
      %s76 = sphi 0, %s75
      %s92 = sphi 0, %s76
    $region4: #{tpu_custom_call.1} parent=1 // loop_header_branch
      %18 = sbr.rel (%p16) target = $region8
    $region5: #{tpu_custom_call.1} parent=1 // loop_body
      %s20 = ssub.s32 %s15, 1
      %s21 = ssub.s32 %s15, 2
      %s22 = sadd.s32 %s15, 1
      %s23 = ssub.s32 %s15, %s22
      %p24 = scmp.eq.s32.totalorder %s23, 0
      %s26 = sadd.s32 %s25, 1
      %s27 = scalar_select %p24, %s25, %s26
      %p30 = pneg %p24
      %p31 = scmp.eq.s32.totalorder %s15, 1
      %p32 = por %p30, %p31
      %p33 = scmp.ne.s32.totalorder %s25, %s28
      %p34 = scmp.eq.s32.totalorder %s15, 0
      %p35 = por %p33, %p34
      %p36 = scmp.ne.s32.totalorder %s25, %s28
      %p37 = scmp.eq.s32.totalorder %s20, 1
      %p38 = por %p36, %p37
      %p39 = scmp.ne.s32.totalorder %s28, %s29
      %p40 = scmp.eq.s32.totalorder %s20, 0
      %p41 = por %p39, %p40
      %p42 = scmp.ne.s32.totalorder %s28, %s29
      %p43 = scmp.eq.s32.totalorder %s21, 1
      %p44 = por %p42, %p43
      %p46 = scmp.ne.s32.totalorder %s29, %s45
      %p47 = scmp.eq.s32.totalorder %s21, 0
      %p48 = por %p46, %p47
      %s50 = sadd.s32 %s49, 1
      %p53 = scmp.eq.s32.totalorder %s15, 1
      %p54 = scmp.ne.s32.totalorder %s49, %s51
      %p55 = scmp.eq.s32.totalorder %s15, 0
      %p56 = por %p54, %p55
      %p57 = scmp.ne.s32.totalorder %s49, %s51
      %p58 = scmp.eq.s32.totalorder %s20, 1
      %p59 = por %p57, %p58
      %p60 = scmp.ne.s32.totalorder %s51, %s52
      %p61 = scmp.eq.s32.totalorder %s20, 0
      %p62 = por %p60, %p61
      %p63 = scmp.ne.s32.totalorder %s51, %s52
      %p64 = scmp.eq.s32.totalorder %s21, 1
      %p65 = por %p63, %p64
      %p67 = scmp.ne.s32.totalorder %s52, %s66
      %p68 = scmp.eq.s32.totalorder %s21, 0
      %p69 = por %p67, %p68
      %s70 = ssub.s32 %s15, %s22
      %p71 = scmp.eq.s32.totalorder %s70, 0
      %s73 = sadd.s32 %s72, 1
      %s74 = scalar_select %p71, %s72, %s73
      %p77 = pneg %p71
      %p78 = scmp.eq.s32.totalorder %s15, 1
      %p79 = por %p77, %p78
      %p80 = scmp.ne.s32.totalorder %s72, %s75
      %p81 = scmp.eq.s32.totalorder %s15, 0
      %p82 = por %p80, %p81
      %p83 = scmp.ne.s32.totalorder %s72, %s75
      %p84 = scmp.eq.s32.totalorder %s20, 1
      %p85 = por %p83, %p84
      %p86 = scmp.ne.s32.totalorder %s75, %s76
      %p87 = scmp.eq.s32.totalorder %s20, 0
      %p88 = por %p86, %p87
      %p89 = scmp.ne.s32.totalorder %s75, %s76
      %p90 = scmp.eq.s32.totalorder %s21, 1
      %p91 = por %p89, %p90
      %p93 = scmp.ne.s32.totalorder %s76, %s92
      %p94 = scmp.eq.s32.totalorder %s21, 0
      %p95 = por %p93, %p94
      %p96 = scmp.le.s32.totalorder 1, %s15
      %p97 = scmp.lt.s32.totalorder %s15, 3
      %p98 = pnand %p96, %p97
      %p99 = pneg %p98
      // Predicated region
      $region9: #{tpu_custom_call.1} parent=5 // pred_check
        _
      $region10: #{tpu_custom_call.1} parent=5 // pred_check_branch
        %101 = sbr.rel (%p98) target = $region12
      $region11: #{tpu_custom_call.1} parent=5 // pred_region
        %s102 = ssub.s32 %s15, 1
        // Predicated region
        $region13: #{tpu_custom_call.1} parent=11 // pred_check
          %p103 = pneg %p62
        $region14: #{tpu_custom_call.1} parent=11 // pred_check_branch
          %105 = sbr.rel (%p103) target = $region16
        $region15: #{tpu_custom_call.1} parent=11 // pred_region
          %s107 = ssub.s32 512, 512
          %108 = vsyncadd [#allocation6], %s107
          %s109 = sshll.u32 [#allocation5], 4
          %s110 = int_to_ptr.vmem [resolvable:$true] %s109
          %115 = dma.hbm_to_vmem [thread:$0]  %s1, 512, %s110, [#allocation6], 128, 128, 8
        $region16: #{tpu_custom_call.1} parent=11 // pred_fallthru
          _
      $region12: #{tpu_custom_call.1} parent=5 // pred_fallthru
        _
      %p116 = scmp.lt.s32.totalorder %s15, 2
      // Predicated region
      $region17: #{tpu_custom_call.1} parent=5 // pred_check
        %p117 = pneg %p116
      $region18: #{tpu_custom_call.1} parent=5 // pred_check_branch
        %119 = sbr.rel (%p117) target = $region20
      $region19: #{tpu_custom_call.1} parent=5 // pred_region
        // Predicated region
        $region21: #{tpu_custom_call.1} parent=19 // pred_check
          %p120 = pneg %p35
        $region22: #{tpu_custom_call.1} parent=19 // pred_check_branch
          %122 = sbr.rel (%p120) target = $region24
        $region23: #{tpu_custom_call.1} parent=19 // pred_region
          %s123 = sand.u32 %s25, 1
          %s124 = scalar_lea.sflag [#allocation3], %s123
          %s125 = sand.u32 %s25, 1
          %s126 = smul.addr %s125, 8
          %s127 = scalar_lea.vmem [#allocation2], %s126
          %s129 = ssub.s32 128, 128
          %130 = vsyncadd %s124, %s129
          %s131 = smul.addr %s15, 128
          %s132 = scalar_lea.hbm %s0, %s131
          %s134 = sshll.u32 %s127, 4
          %s135 = int_to_ptr.vmem [resolvable:$true] %s134
          %137 = dma.hbm_to_vmem [thread:$0]  %s132, 128, %s135, %s124
        $region24: #{tpu_custom_call.1} parent=19 // pred_fallthru
          _
      $region20: #{tpu_custom_call.1} parent=5 // pred_fallthru
        _
      %p138 = scmp.le.s32.totalorder 1, %s15
      %p139 = scmp.lt.s32.totalorder %s15, 3
      %p140 = pnand %p138, %p139
      %p141 = pneg %p140
      // Predicated region
      $region25: #{tpu_custom_call.1} parent=5 // pred_check
        _
      $region26: #{tpu_custom_call.1} parent=5 // pred_check_branch
        %143 = sbr.rel (%p140) target = $region28
      $region27: #{tpu_custom_call.1} parent=5 // pred_region
        %s144 = ssub.s32 %s15, 1
        %s145 = sand.u32 %s28, 1
        %s146 = scalar_lea.sflag [#allocation3], %s145
        %s147 = sand.u32 %s28, 1
        %s148 = smul.addr %s147, 8
        %s149 = scalar_lea.vmem [#allocation2], %s148
        // Predicated region
        $region29: #{tpu_custom_call.1} parent=27 // pred_check
          %p150 = pneg %p41
        $region30: #{tpu_custom_call.1} parent=27 // pred_check_branch
          %152 = sbr.rel (%p150) target = $region32
        $region31: #{tpu_custom_call.1} parent=27 // pred_region
          %153 = dma.done %s146, 128
        $region32: #{tpu_custom_call.1} parent=27 // pred_fallthru
          _
        // Predicated region
        $region33: #{tpu_custom_call.1} parent=27 // pred_check
          %p154 = pneg %p62
        $region34: #{tpu_custom_call.1} parent=27 // pred_check_branch
          %156 = sbr.rel (%p154) target = $region36
        $region35: #{tpu_custom_call.1} parent=27 // pred_region
          %157 = dma.done [#allocation6], 512
        $region36: #{tpu_custom_call.1} parent=27 // pred_fallthru
          _
        %s158 = sand.u32 %s28, 1
        %s159 = scalar_lea.sflag [#allocation3], %s158
        %s160 = sand.u32 %s28, 1
        %s161 = smul.addr %s160, 8
        %s162 = scalar_lea.vmem [#allocation2], %s161
        %p163 = pneg %p41
        %p164 = pneg %p38
        %p165 = pneg %p62
        %p166 = pneg %p59
        %p167 = pneg %p88
        %p168 = pneg %p85
        %s169 = sand.u32 %s75, 1
        %s170 = scalar_lea.sflag [#allocation4], %s169
        %s171 = sand.u32 %s75, 1
        %s172 = smul.addr %s171, 8
        %s173 = scalar_lea.vmem [#allocation7], %s172
        %v174 = vld [vmem:[%s149] sm:$0xff]
        %v175 = vld [vmem:[#allocation5] sm:$0xff]
        %v176 = vld [vmem:[#allocation5 + $0x8] sm:$0xff]
        %v177 = vld [vmem:[#allocation5 + $0x10] sm:$0xff]
        %v178 = vld [vmem:[#allocation5 + $0x18] sm:$0xff]
        %vm179 = vcmask 261120
        %v181 = vsel %vm179, %v174, 0
        %183 = vmatprep.subr.mxu0 0.0
        %184 = vmatpush1.msra.mxu0 0.0
        %185 = vmatprep.subr.mxu0 0.0
        %186 = vmatpush1.msra.mxu0 0.0
        %187 = vmatprep.subr.mxu0 0.0
        %188 = vmatpush1.msra.mxu0 0.0
        %189 = vmatprep.subr.mxu0 0.0
        %190 = vmatpush1.msra.mxu0 0.0
        %191 = vmatprep.subr.mxu0 0.0
        %192 = vmatpush1.msra.mxu0 0.0
        %193 = vmatprep.subr.mxu0 0.0
        %194 = vmatpush1.msra.mxu0 0.0
        %195 = vmatprep.subr.mxu0 0.0
        %196 = vmatpush1.msra.mxu0 0.0
        %197 = vmatprep.subr.mxu0 0.0
        %198 = vmatpush1.msra.mxu0 0.0
        %199 = vmatprep.subr.mxu0 0.0
        %200 = vmatpush1.msra.mxu0 0.0
        %201 = vmatprep.subr.mxu0 0.0
        %202 = vmatpush1.msra.mxu0 0.0
        %203 = vmatprep.subr.mxu0 0.0
        %204 = vmatpush1.msra.mxu0 0.0
        %205 = vmatprep.subr.mxu0 0.0
        %206 = vmatpush1.msra.mxu0 0.0
        %207 = vmatprep.subr.mxu0 0.0
        %208 = vmatpush1.msra.mxu0 %v178
        %209 = vmatprep.subr.mxu0 0.0
        %210 = vmatpush1.msra.mxu0 %v177
        %211 = vmatprep.subr.mxu0 0.0
        %212 = vmatpush1.msra.mxu0 %v176
        %213 = vmatprep.subr.mxu0 0.0
        %214 = vmatpush1.msra.mxu0 %v175
        %215 = vmatprep.subr.mxu0 0.0
        %216 = vmatpush2.msra.mxu0 0.0
        %217 = vmatprep.subr.mxu0 0.0
        %218 = vmatpush2.msra.mxu0 0.0
        %219 = vmatprep.subr.mxu0 0.0
        %220 = vmatpush2.msra.mxu0 0.0
        %221 = vmatprep.subr.mxu0 0.0
        %222 = vmatpush2.msra.mxu0 0.0
        %223 = vmatprep.subr.mxu0 0.0
        %224 = vmatpush2.msra.mxu0 0.0
        %225 = vmatprep.subr.mxu0 0.0
        %226 = vmatpush2.msra.mxu0 0.0
        %227 = vmatprep.subr.mxu0 0.0
        %228 = vmatpush2.msra.mxu0 0.0
        %229 = vmatprep.subr.mxu0 0.0
        %230 = vmatpush2.msra.mxu0 0.0
        %231 = vmatprep.subr.mxu0 0.0
        %232 = vmatpush2.msra.mxu0 0.0
        %233 = vmatprep.subr.mxu0 0.0
        %234 = vmatpush2.msra.mxu0 0.0
        %235 = vmatprep.subr.mxu0 0.0
        %236 = vmatpush2.msra.mxu0 0.0
        %237 = vmatprep.subr.mxu0 0.0
        %238 = vmatpush2.msra.mxu0 0.0
        %239 = vmatprep.subr.mxu0 0.0
        %240 = vmatpush2.msra.mxu0 0.0
        %241 = vmatprep.subr.mxu0 0.0
        %242 = vmatpush2.msra.mxu0 0.0
        %243 = vmatprep.subr.mxu0 0.0
        %244 = vmatpush2.msra.mxu0 0.0
        %245 = vmatprep.subr.mxu0 0.0
        %246 = vmatpush2.msra.mxu0 0.0
        %247 = vmatprep.mubr.f32.mxu0 0.0
        %248 = vmatmul.mubr.f32.gmra.mxu0 %v181
        %v249 = vpop.f32.mrf.mxu0
        %v250 = vadd.f32 0.0, %v249
        %v251 = vpop.f32.mrf.mxu0
        %252 = vdwg.mxu0
        %254 = vrot.lane.b32.xlu0 %v250, 120
        %v255 = vpop.permute.xlu0 %254
        %256 = vrot.lane.b32.xlu0 %v250, 112
        %v257 = vpop.permute.xlu0 %256
        %258 = vrot.lane.b32.xlu0 %v250, 104
        %v259 = vpop.permute.xlu0 %258
        %260 = vrot.lane.b32.xlu0 %v250, 96
        %v261 = vpop.permute.xlu0 %260
        %262 = vrot.lane.b32.xlu0 %v255, 96
        %v263 = vpop.permute.xlu0 %262
        %264 = vrot.lane.b32.xlu0 %v257, 96
        %v265 = vpop.permute.xlu0 %264
        %266 = vrot.lane.b32.xlu0 %v259, 96
        %v267 = vpop.permute.xlu0 %266
        %272 = vxpose.xlu0.b32.start [1/16] %v261, 128
        %273 = vxpose.xlu0.b32.cont [2/16] 0.0, 128
        %274 = vxpose.xlu0.b32.cont [3/16] 0.0, 128
        %275 = vxpose.xlu0.b32.cont [4/16] 0.0, 128
        %276 = vxpose.xlu0.b32.cont [5/16] 0.0, 128
        %277 = vxpose.xlu0.b32.cont [6/16] 0.0, 128
        %278 = vxpose.xlu0.b32.cont [7/16] 0.0, 128
        %279 = vxpose.xlu0.b32.cont [8/16] 0.0, 128
        %280 = vxpose.xlu0.b32.cont [9/16] 0.0, 128
        %281 = vxpose.xlu0.b32.cont [10/16] 0.0, 128
        %282 = vxpose.xlu0.b32.cont [11/16] 0.0, 128
        %283 = vxpose.xlu0.b32.cont [12/16] 0.0, 128
        %284 = vxpose.xlu0.b32.cont [13/16] 0.0, 128
        %285 = vxpose.xlu0.b32.cont [14/16] 0.0, 128
        %286 = vxpose.xlu0.b32.cont [15/16] 0.0, 128
        %287 = vxpose.xlu0.b32.end [16/16] 0.0, 128
        %v288 = vpop.trf.xlu0
        %v289 = vpop.trf.xlu0
        %v290 = vpop.trf.xlu0
        %v291 = vpop.trf.xlu0
        %v292 = vpop.trf.xlu0
        %v293 = vpop.trf.xlu0
        %v294 = vpop.trf.xlu0
        %v295 = vpop.trf.xlu0
        %v296 = vpop.trf.xlu0
        %v297 = vpop.trf.xlu0
        %v298 = vpop.trf.xlu0
        %v299 = vpop.trf.xlu0
        %v300 = vpop.trf.xlu0
        %v301 = vpop.trf.xlu0
        %v302 = vpop.trf.xlu0
        %v303 = vpop.trf.xlu0
        %304 = vxpose.xlu0.b32.start [1/16] %v263, 128
        %305 = vxpose.xlu0.b32.cont [2/16] 0.0, 128
        %306 = vxpose.xlu0.b32.cont [3/16] 0.0, 128
        %307 = vxpose.xlu0.b32.cont [4/16] 0.0, 128
        %308 = vxpose.xlu0.b32.cont [5/16] 0.0, 128
        %309 = vxpose.xlu0.b32.cont [6/16] 0.0, 128
        %310 = vxpose.xlu0.b32.cont [7/16] 0.0, 128
        %311 = vxpose.xlu0.b32.cont [8/16] 0.0, 128
        %312 = vxpose.xlu0.b32.cont [9/16] 0.0, 128
        %313 = vxpose.xlu0.b32.cont [10/16] 0.0, 128
        %314 = vxpose.xlu0.b32.cont [11/16] 0.0, 128
        %315 = vxpose.xlu0.b32.cont [12/16] 0.0, 128
        %316 = vxpose.xlu0.b32.cont [13/16] 0.0, 128
        %317 = vxpose.xlu0.b32.cont [14/16] 0.0, 128
        %318 = vxpose.xlu0.b32.cont [15/16] 0.0, 128
        %319 = vxpose.xlu0.b32.end [16/16] 0.0, 128
        %v320 = vpop.trf.xlu0
        %v321 = vpop.trf.xlu0
        %v322 = vpop.trf.xlu0
        %v323 = vpop.trf.xlu0
        %v324 = vpop.trf.xlu0
        %v325 = vpop.trf.xlu0
        %v326 = vpop.trf.xlu0
        %v327 = vpop.trf.xlu0
        %v328 = vpop.trf.xlu0
        %v329 = vpop.trf.xlu0
        %v330 = vpop.trf.xlu0
        %v331 = vpop.trf.xlu0
        %v332 = vpop.trf.xlu0
        %v333 = vpop.trf.xlu0
        %v334 = vpop.trf.xlu0
        %v335 = vpop.trf.xlu0
        %336 = vxpose.xlu0.b32.start [1/16] %v265, 128
        %337 = vxpose.xlu0.b32.cont [2/16] 0.0, 128
        %338 = vxpose.xlu0.b32.cont [3/16] 0.0, 128
        %339 = vxpose.xlu0.b32.cont [4/16] 0.0, 128
        %340 = vxpose.xlu0.b32.cont [5/16] 0.0, 128
        %341 = vxpose.xlu0.b32.cont [6/16] 0.0, 128
        %342 = vxpose.xlu0.b32.cont [7/16] 0.0, 128
        %343 = vxpose.xlu0.b32.cont [8/16] 0.0, 128
        %344 = vxpose.xlu0.b32.cont [9/16] 0.0, 128
        %345 = vxpose.xlu0.b32.cont [10/16] 0.0, 128
        %346 = vxpose.xlu0.b32.cont [11/16] 0.0, 128
        %347 = vxpose.xlu0.b32.cont [12/16] 0.0, 128
        %348 = vxpose.xlu0.b32.cont [13/16] 0.0, 128
        %349 = vxpose.xlu0.b32.cont [14/16] 0.0, 128
        %350 = vxpose.xlu0.b32.cont [15/16] 0.0, 128
        %351 = vxpose.xlu0.b32.end [16/16] 0.0, 128
        %v352 = vpop.trf.xlu0
        %v353 = vpop.trf.xlu0
        %v354 = vpop.trf.xlu0
        %v355 = vpop.trf.xlu0
        %v356 = vpop.trf.xlu0
        %v357 = vpop.trf.xlu0
        %v358 = vpop.trf.xlu0
        %v359 = vpop.trf.xlu0
        %v360 = vpop.trf.xlu0
        %v361 = vpop.trf.xlu0
        %v362 = vpop.trf.xlu0
        %v363 = vpop.trf.xlu0
        %v364 = vpop.trf.xlu0
        %v365 = vpop.trf.xlu0
        %v366 = vpop.trf.xlu0
        %v367 = vpop.trf.xlu0
        %368 = vxpose.xlu0.b32.start [1/16] %v267, 128
        %369 = vxpose.xlu0.b32.cont [2/16] 0.0, 128
        %370 = vxpose.xlu0.b32.cont [3/16] 0.0, 128
        %371 = vxpose.xlu0.b32.cont [4/16] 0.0, 128
        %372 = vxpose.xlu0.b32.cont [5/16] 0.0, 128
        %373 = vxpose.xlu0.b32.cont [6/16] 0.0, 128
        %374 = vxpose.xlu0.b32.cont [7/16] 0.0, 128
        %375 = vxpose.xlu0.b32.cont [8/16] 0.0, 128
        %376 = vxpose.xlu0.b32.cont [9/16] 0.0, 128
        %377 = vxpose.xlu0.b32.cont [10/16] 0.0, 128
        %378 = vxpose.xlu0.b32.cont [11/16] 0.0, 128
        %379 = vxpose.xlu0.b32.cont [12/16] 0.0, 128
        %380 = vxpose.xlu0.b32.cont [13/16] 0.0, 128
        %381 = vxpose.xlu0.b32.cont [14/16] 0.0, 128
        %382 = vxpose.xlu0.b32.cont [15/16] 0.0, 128
        %383 = vxpose.xlu0.b32.end [16/16] 0.0, 128
        %v384 = vpop.trf.xlu0
        %v385 = vpop.trf.xlu0
        %v386 = vpop.trf.xlu0
        %v387 = vpop.trf.xlu0
        %v388 = vpop.trf.xlu0
        %v389 = vpop.trf.xlu0
        %v390 = vpop.trf.xlu0
        %v391 = vpop.trf.xlu0
        %v392 = vpop.trf.xlu0
        %v393 = vpop.trf.xlu0
        %v394 = vpop.trf.xlu0
        %v395 = vpop.trf.xlu0
        %v396 = vpop.trf.xlu0
        %v397 = vpop.trf.xlu0
        %v398 = vpop.trf.xlu0
        %v399 = vpop.trf.xlu0
        %vm400 = vcmask 64512
        %v401 = vsel %vm400, %v250, 0
        %403 = vmatprep.subr.mxu0 0.0
        %404 = vmatpush1.msra.mxu0 0.0
        %405 = vmatprep.subr.mxu0 0.0
        %406 = vmatpush1.msra.mxu0 0.0
        %407 = vmatprep.subr.mxu0 0.0
        %408 = vmatpush1.msra.mxu0 0.0
        %409 = vmatprep.subr.mxu0 0.0
        %410 = vmatpush1.msra.mxu0 0.0
        %411 = vmatprep.subr.mxu0 0.0
        %412 = vmatpush1.msra.mxu0 0.0
        %413 = vmatprep.subr.mxu0 0.0
        %414 = vmatpush1.msra.mxu0 0.0
        %415 = vmatprep.subr.mxu0 0.0
        %416 = vmatpush1.msra.mxu0 0.0
        %417 = vmatprep.subr.mxu0 0.0
        %418 = vmatpush1.msra.mxu0 0.0
        %419 = vmatprep.subr.mxu0 0.0
        %420 = vmatpush1.msra.mxu0 0.0
        %421 = vmatprep.subr.mxu0 0.0
        %422 = vmatpush1.msra.mxu0 0.0
        %423 = vmatprep.subr.mxu0 0.0
        %424 = vmatpush1.msra.mxu0 0.0
        %425 = vmatprep.subr.mxu0 0.0
        %426 = vmatpush1.msra.mxu0 0.0
        %427 = vmatprep.subr.mxu0 0.0
        %428 = vmatpush1.msra.mxu0 0.0
        %429 = vmatprep.subr.mxu0 0.0
        %430 = vmatpush1.msra.mxu0 0.0
        %431 = vmatprep.subr.mxu0 0.0
        %432 = vmatpush1.msra.mxu0 0.0
        %433 = vmatprep.subr.mxu0 0.0
        %434 = vmatpush1.msra.mxu0 %v288
        %435 = vmatprep.subr.mxu0 0.0
        %436 = vmatpush2.msra.mxu0 0.0
        %437 = vmatprep.subr.mxu0 0.0
        %438 = vmatpush2.msra.mxu0 0.0
        %439 = vmatprep.subr.mxu0 0.0
        %440 = vmatpush2.msra.mxu0 0.0
        %441 = vmatprep.subr.mxu0 0.0
        %442 = vmatpush2.msra.mxu0 0.0
        %443 = vmatprep.subr.mxu0 0.0
        %444 = vmatpush2.msra.mxu0 0.0
        %445 = vmatprep.subr.mxu0 0.0
        %446 = vmatpush2.msra.mxu0 0.0
        %447 = vmatprep.subr.mxu0 0.0
        %448 = vmatpush2.msra.mxu0 0.0
        %449 = vmatprep.subr.mxu0 0.0
        %450 = vmatpush2.msra.mxu0 0.0
        %451 = vmatprep.subr.mxu0 0.0
        %452 = vmatpush2.msra.mxu0 0.0
        %453 = vmatprep.subr.mxu0 0.0
        %454 = vmatpush2.msra.mxu0 0.0
        %455 = vmatprep.subr.mxu0 0.0
        %456 = vmatpush2.msra.mxu0 0.0
        %457 = vmatprep.subr.mxu0 0.0
        %458 = vmatpush2.msra.mxu0 0.0
        %459 = vmatprep.subr.mxu0 0.0
        %460 = vmatpush2.msra.mxu0 0.0
        %461 = vmatprep.subr.mxu0 0.0
        %462 = vmatpush2.msra.mxu0 0.0
        %463 = vmatprep.subr.mxu0 0.0
        %464 = vmatpush2.msra.mxu0 0.0
        %465 = vmatprep.subr.mxu0 0.0
        %466 = vmatpush2.msra.mxu0 0.0
        %467 = vmatprep.mubr.f32.mxu0 0.0
        %468 = vmatmul.mubr.f32.gmra.mxu0 %v401
        %v469 = vpop.f32.mrf.mxu0
        %v470 = vadd.f32 0.0, %v469
        %v471 = vpop.f32.mrf.mxu0
        %472 = vdwg.mxu0
        %v473 = vsel %vm400, %v255, 0
        %475 = vmatprep.subr.mxu0 0.0
        %476 = vmatpush1.msra.mxu0 0.0
        %477 = vmatprep.subr.mxu0 0.0
        %478 = vmatpush1.msra.mxu0 0.0
        %479 = vmatprep.subr.mxu0 0.0
        %480 = vmatpush1.msra.mxu0 0.0
        %481 = vmatprep.subr.mxu0 0.0
        %482 = vmatpush1.msra.mxu0 0.0
        %483 = vmatprep.subr.mxu0 0.0
        %484 = vmatpush1.msra.mxu0 0.0
        %485 = vmatprep.subr.mxu0 0.0
        %486 = vmatpush1.msra.mxu0 0.0
        %487 = vmatprep.subr.mxu0 0.0
        %488 = vmatpush1.msra.mxu0 0.0
        %489 = vmatprep.subr.mxu0 0.0
        %490 = vmatpush1.msra.mxu0 0.0
        %491 = vmatprep.subr.mxu0 0.0
        %492 = vmatpush1.msra.mxu0 0.0
        %493 = vmatprep.subr.mxu0 0.0
        %494 = vmatpush1.msra.mxu0 0.0
        %495 = vmatprep.subr.mxu0 0.0
        %496 = vmatpush1.msra.mxu0 0.0
        %497 = vmatprep.subr.mxu0 0.0
        %498 = vmatpush1.msra.mxu0 0.0
        %499 = vmatprep.subr.mxu0 0.0
        %500 = vmatpush1.msra.mxu0 0.0
        %501 = vmatprep.subr.mxu0 0.0
        %502 = vmatpush1.msra.mxu0 0.0
        %503 = vmatprep.subr.mxu0 0.0
        %504 = vmatpush1.msra.mxu0 0.0
        %505 = vmatprep.subr.mxu0 0.0
        %506 = vmatpush1.msra.mxu0 %v320
        %507 = vmatprep.subr.mxu0 0.0
        %508 = vmatpush2.msra.mxu0 0.0
        %509 = vmatprep.subr.mxu0 0.0
        %510 = vmatpush2.msra.mxu0 0.0
        %511 = vmatprep.subr.mxu0 0.0
        %512 = vmatpush2.msra.mxu0 0.0
        %513 = vmatprep.subr.mxu0 0.0
        %514 = vmatpush2.msra.mxu0 0.0
        %515 = vmatprep.subr.mxu0 0.0
        %516 = vmatpush2.msra.mxu0 0.0
        %517 = vmatprep.subr.mxu0 0.0
        %518 = vmatpush2.msra.mxu0 0.0
        %519 = vmatprep.subr.mxu0 0.0
        %520 = vmatpush2.msra.mxu0 0.0
        %521 = vmatprep.subr.mxu0 0.0
        %522 = vmatpush2.msra.mxu0 0.0
        %523 = vmatprep.subr.mxu0 0.0
        %524 = vmatpush2.msra.mxu0 0.0
        %525 = vmatprep.subr.mxu0 0.0
        %526 = vmatpush2.msra.mxu0 0.0
        %527 = vmatprep.subr.mxu0 0.0
        %528 = vmatpush2.msra.mxu0 0.0
        %529 = vmatprep.subr.mxu0 0.0
        %530 = vmatpush2.msra.mxu0 0.0
        %531 = vmatprep.subr.mxu0 0.0
        %532 = vmatpush2.msra.mxu0 0.0
        %533 = vmatprep.subr.mxu0 0.0
        %534 = vmatpush2.msra.mxu0 0.0
        %535 = vmatprep.subr.mxu0 0.0
        %536 = vmatpush2.msra.mxu0 0.0
        %537 = vmatprep.subr.mxu0 0.0
        %538 = vmatpush2.msra.mxu0 0.0
        %539 = vmatprep.mubr.f32.mxu0 0.0
        %540 = vmatmul.mubr.f32.gmra.mxu0 %v473
        %v541 = vpop.f32.mrf.mxu0
        %v542 = vadd.f32 0.0, %v541
        %v543 = vpop.f32.mrf.mxu0
        %544 = vdwg.mxu0
        %v545 = vsel %vm400, %v257, 0
        %547 = vmatprep.subr.mxu0 0.0
        %548 = vmatpush1.msra.mxu0 0.0
        %549 = vmatprep.subr.mxu0 0.0
        %550 = vmatpush1.msra.mxu0 0.0
        %551 = vmatprep.subr.mxu0 0.0
        %552 = vmatpush1.msra.mxu0 0.0
        %553 = vmatprep.subr.mxu0 0.0
        %554 = vmatpush1.msra.mxu0 0.0
        %555 = vmatprep.subr.mxu0 0.0
        %556 = vmatpush1.msra.mxu0 0.0
        %557 = vmatprep.subr.mxu0 0.0
        %558 = vmatpush1.msra.mxu0 0.0
        %559 = vmatprep.subr.mxu0 0.0
        %560 = vmatpush1.msra.mxu0 0.0
        %561 = vmatprep.subr.mxu0 0.0
        %562 = vmatpush1.msra.mxu0 0.0
        %563 = vmatprep.subr.mxu0 0.0
        %564 = vmatpush1.msra.mxu0 0.0
        %565 = vmatprep.subr.mxu0 0.0
        %566 = vmatpush1.msra.mxu0 0.0
        %567 = vmatprep.subr.mxu0 0.0
        %568 = vmatpush1.msra.mxu0 0.0
        %569 = vmatprep.subr.mxu0 0.0
        %570 = vmatpush1.msra.mxu0 0.0
        %571 = vmatprep.subr.mxu0 0.0
        %572 = vmatpush1.msra.mxu0 0.0
        %573 = vmatprep.subr.mxu0 0.0
        %574 = vmatpush1.msra.mxu0 0.0
        %575 = vmatprep.subr.mxu0 0.0
        %576 = vmatpush1.msra.mxu0 0.0
        %577 = vmatprep.subr.mxu0 0.0
        %578 = vmatpush1.msra.mxu0 %v352
        %579 = vmatprep.subr.mxu0 0.0
        %580 = vmatpush2.msra.mxu0 0.0
        %581 = vmatprep.subr.mxu0 0.0
        %582 = vmatpush2.msra.mxu0 0.0
        %583 = vmatprep.subr.mxu0 0.0
        %584 = vmatpush2.msra.mxu0 0.0
        %585 = vmatprep.subr.mxu0 0.0
        %586 = vmatpush2.msra.mxu0 0.0
        %587 = vmatprep.subr.mxu0 0.0
        %588 = vmatpush2.msra.mxu0 0.0
        %589 = vmatprep.subr.mxu0 0.0
        %590 = vmatpush2.msra.mxu0 0.0
        %591 = vmatprep.subr.mxu0 0.0
        %592 = vmatpush2.msra.mxu0 0.0
        %593 = vmatprep.subr.mxu0 0.0
        %594 = vmatpush2.msra.mxu0 0.0
        %595 = vmatprep.subr.mxu0 0.0
        %596 = vmatpush2.msra.mxu0 0.0
        %597 = vmatprep.subr.mxu0 0.0
        %598 = vmatpush2.msra.mxu0 0.0
        %599 = vmatprep.subr.mxu0 0.0
        %600 = vmatpush2.msra.mxu0 0.0
        %601 = vmatprep.subr.mxu0 0.0
        %602 = vmatpush2.msra.mxu0 0.0
        %603 = vmatprep.subr.mxu0 0.0
        %604 = vmatpush2.msra.mxu0 0.0
        %605 = vmatprep.subr.mxu0 0.0
        %606 = vmatpush2.msra.mxu0 0.0
        %607 = vmatprep.subr.mxu0 0.0
        %608 = vmatpush2.msra.mxu0 0.0
        %609 = vmatprep.subr.mxu0 0.0
        %610 = vmatpush2.msra.mxu0 0.0
        %611 = vmatprep.mubr.f32.mxu0 0.0
        %612 = vmatmul.mubr.f32.gmra.mxu0 %v545
        %v613 = vpop.f32.mrf.mxu0
        %v614 = vadd.f32 0.0, %v613
        %v615 = vpop.f32.mrf.mxu0
        %616 = vdwg.mxu0
        %v617 = vsel %vm400, %v259, 0
        %619 = vmatprep.subr.mxu0 0.0
        %620 = vmatpush1.msra.mxu0 0.0
        %621 = vmatprep.subr.mxu0 0.0
        %622 = vmatpush1.msra.mxu0 0.0
        %623 = vmatprep.subr.mxu0 0.0
        %624 = vmatpush1.msra.mxu0 0.0
        %625 = vmatprep.subr.mxu0 0.0
        %626 = vmatpush1.msra.mxu0 0.0
        %627 = vmatprep.subr.mxu0 0.0
        %628 = vmatpush1.msra.mxu0 0.0
        %629 = vmatprep.subr.mxu0 0.0
        %630 = vmatpush1.msra.mxu0 0.0
        %631 = vmatprep.subr.mxu0 0.0
        %632 = vmatpush1.msra.mxu0 0.0
        %633 = vmatprep.subr.mxu0 0.0
        %634 = vmatpush1.msra.mxu0 0.0
        %635 = vmatprep.subr.mxu0 0.0
        %636 = vmatpush1.msra.mxu0 0.0
        %637 = vmatprep.subr.mxu0 0.0
        %638 = vmatpush1.msra.mxu0 0.0
        %639 = vmatprep.subr.mxu0 0.0
        %640 = vmatpush1.msra.mxu0 0.0
        %641 = vmatprep.subr.mxu0 0.0
        %642 = vmatpush1.msra.mxu0 0.0
        %643 = vmatprep.subr.mxu0 0.0
        %644 = vmatpush1.msra.mxu0 0.0
        %645 = vmatprep.subr.mxu0 0.0
        %646 = vmatpush1.msra.mxu0 0.0
        %647 = vmatprep.subr.mxu0 0.0
        %648 = vmatpush1.msra.mxu0 0.0
        %649 = vmatprep.subr.mxu0 0.0
        %650 = vmatpush1.msra.mxu0 %v384
        %651 = vmatprep.subr.mxu0 0.0
        %652 = vmatpush2.msra.mxu0 0.0
        %653 = vmatprep.subr.mxu0 0.0
        %654 = vmatpush2.msra.mxu0 0.0
        %655 = vmatprep.subr.mxu0 0.0
        %656 = vmatpush2.msra.mxu0 0.0
        %657 = vmatprep.subr.mxu0 0.0
        %658 = vmatpush2.msra.mxu0 0.0
        %659 = vmatprep.subr.mxu0 0.0
        %660 = vmatpush2.msra.mxu0 0.0
        %661 = vmatprep.subr.mxu0 0.0
        %662 = vmatpush2.msra.mxu0 0.0
        %663 = vmatprep.subr.mxu0 0.0
        %664 = vmatpush2.msra.mxu0 0.0
        %665 = vmatprep.subr.mxu0 0.0
        %666 = vmatpush2.msra.mxu0 0.0
        %667 = vmatprep.subr.mxu0 0.0
        %668 = vmatpush2.msra.mxu0 0.0
        %669 = vmatprep.subr.mxu0 0.0
        %670 = vmatpush2.msra.mxu0 0.0
        %671 = vmatprep.subr.mxu0 0.0
        %672 = vmatpush2.msra.mxu0 0.0
        %673 = vmatprep.subr.mxu0 0.0
        %674 = vmatpush2.msra.mxu0 0.0
        %675 = vmatprep.subr.mxu0 0.0
        %676 = vmatpush2.msra.mxu0 0.0
        %677 = vmatprep.subr.mxu0 0.0
        %678 = vmatpush2.msra.mxu0 0.0
        %679 = vmatprep.subr.mxu0 0.0
        %680 = vmatpush2.msra.mxu0 0.0
        %681 = vmatprep.subr.mxu0 0.0
        %682 = vmatpush2.msra.mxu0 0.0
        %683 = vmatprep.mubr.f32.mxu0 0.0
        %684 = vmatmul.mubr.f32.gmra.mxu0 %v617
        %v685 = vpop.f32.mrf.mxu0
        %v686 = vadd.f32 0.0, %v685
        %v687 = vpop.f32.mrf.mxu0
        %688 = vdwg.mxu0
        %v689 = vmul.f32 %v470, 0.17677669
        %v690 = vmul.f32 %v542, 0.17677669
        %v691 = vmul.f32 %v614, 0.17677669
        %v692 = vmul.f32 %v686, 0.17677669
        %v693 = vlaneseq
        %v694 = vshrl.u32 %v693, 7
        %v695 = vlaneseq
        %v696 = vand.u32 %v695, 127
        %vm697 = vcmp.le.s32.totalorder %v696, %v694
        %v698 = vsel %vm697, 1, 0
        %vm699 = vcmp.eq.s32.totalorder %v698, 1
        %v700 = vsel %vm699, %v689, -1e+30
        %v701 = vsel %vm699, %v690, -1e+30
        %v702 = vsel %vm699, %v691, -1e+30
        %v703 = vsel %vm699, %v692, -1e+30
        %v704 = vsel %vm400, %v700, -inf
        %705 = vmax.xlane.f32.xlu0 %v704
        %v706 = vpop.xlane.xlu0 %705
        %v707 = vsel %vm400, %v701, -inf
        %708 = vmax.xlane.f32.xlu0 %v707
        %v709 = vpop.xlane.xlu0 %708
        %v710 = vsel %vm400, %v702, -inf
        %711 = vmax.xlane.f32.xlu0 %v710
        %v712 = vpop.xlane.xlu0 %711
        %v713 = vsel %vm400, %v703, -inf
        %714 = vmax.xlane.f32.xlu0 %v713
        %v715 = vpop.xlane.xlu0 %714
        %v716 = vsub.f32 %v700, %v706
        %v717 = vsub.f32 %v701, %v709
        %v718 = vsub.f32 %v702, %v712
        %v719 = vsub.f32 %v703, %v715
        %v720 = vmul.f32 %v716, 1.442695
        %v721 = vpow.pop %v720
        %v722 = vmul.f32 %v717, 1.442695
        %v723 = vpow.pop %v722
        %v724 = vmul.f32 %v718, 1.442695
        %v725 = vpow.pop %v724
        %v726 = vmul.f32 %v719, 1.442695
        %v727 = vpow.pop %v726
        %v728 = vsel %vm400, %v721, 0.0
        %729 = vadd.xlane.f32.xlu0 %v728
        %v730 = vpop.xlane.xlu0 %729
        %v731 = vsel %vm400, %v723, 0.0
        %732 = vadd.xlane.f32.xlu0 %v731
        %v733 = vpop.xlane.xlu0 %732
        %v734 = vsel %vm400, %v725, 0.0
        %735 = vadd.xlane.f32.xlu0 %v734
        %v736 = vpop.xlane.xlu0 %735
        %v737 = vsel %vm400, %v727, 0.0
        %738 = vadd.xlane.f32.xlu0 %v737
        %v739 = vpop.xlane.xlu0 %738
        %v740 = vrcp.pop %v730
        %v741 = vrcp.pop %v733
        %v742 = vrcp.pop %v736
        %v743 = vrcp.pop %v739
        %v744 = vmul.f32 %v721, %v740
        %v745 = vmul.f32 %v723, %v741
        %v746 = vmul.f32 %v725, %v742
        %v747 = vmul.f32 %v727, %v743
        %748 = vrot.lane.b32.xlu0 %v250, 64
        %v749 = vpop.permute.xlu0 %748
        %750 = vrot.lane.b32.xlu0 %v255, 64
        %v751 = vpop.permute.xlu0 %750
        %752 = vrot.lane.b32.xlu0 %v257, 64
        %v753 = vpop.permute.xlu0 %752
        %754 = vrot.lane.b32.xlu0 %v259, 64
        %v755 = vpop.permute.xlu0 %754
        %760 = vxpose.xlu0.b32.start [1/16] %v749, 128
        %761 = vxpose.xlu0.b32.cont [2/16] 0.0, 128
        %762 = vxpose.xlu0.b32.cont [3/16] 0.0, 128
        %763 = vxpose.xlu0.b32.cont [4/16] 0.0, 128
        %764 = vxpose.xlu0.b32.cont [5/16] 0.0, 128
        %765 = vxpose.xlu0.b32.cont [6/16] 0.0, 128
        %766 = vxpose.xlu0.b32.cont [7/16] 0.0, 128
        %767 = vxpose.xlu0.b32.cont [8/16] 0.0, 128
        %768 = vxpose.xlu0.b32.cont [9/16] 0.0, 128
        %769 = vxpose.xlu0.b32.cont [10/16] 0.0, 128
        %770 = vxpose.xlu0.b32.cont [11/16] 0.0, 128
        %771 = vxpose.xlu0.b32.cont [12/16] 0.0, 128
        %772 = vxpose.xlu0.b32.cont [13/16] 0.0, 128
        %773 = vxpose.xlu0.b32.cont [14/16] 0.0, 128
        %774 = vxpose.xlu0.b32.cont [15/16] 0.0, 128
        %775 = vxpose.xlu0.b32.end [16/16] 0.0, 128
        %v776 = vpop.trf.xlu0
        %v777 = vpop.trf.xlu0
        %v778 = vpop.trf.xlu0
        %v779 = vpop.trf.xlu0
        %v780 = vpop.trf.xlu0
        %v781 = vpop.trf.xlu0
        %v782 = vpop.trf.xlu0
        %v783 = vpop.trf.xlu0
        %v784 = vpop.trf.xlu0
        %v785 = vpop.trf.xlu0
        %v786 = vpop.trf.xlu0
        %v787 = vpop.trf.xlu0
        %v788 = vpop.trf.xlu0
        %v789 = vpop.trf.xlu0
        %v790 = vpop.trf.xlu0
        %v791 = vpop.trf.xlu0
        %792 = vxpose.xlu0.b32.start [1/16] %v751, 128
        %793 = vxpose.xlu0.b32.cont [2/16] 0.0, 128
        %794 = vxpose.xlu0.b32.cont [3/16] 0.0, 128
        %795 = vxpose.xlu0.b32.cont [4/16] 0.0, 128
        %796 = vxpose.xlu0.b32.cont [5/16] 0.0, 128
        %797 = vxpose.xlu0.b32.cont [6/16] 0.0, 128
        %798 = vxpose.xlu0.b32.cont [7/16] 0.0, 128
        %799 = vxpose.xlu0.b32.cont [8/16] 0.0, 128
        %800 = vxpose.xlu0.b32.cont [9/16] 0.0, 128
        %801 = vxpose.xlu0.b32.cont [10/16] 0.0, 128
        %802 = vxpose.xlu0.b32.cont [11/16] 0.0, 128
        %803 = vxpose.xlu0.b32.cont [12/16] 0.0, 128
        %804 = vxpose.xlu0.b32.cont [13/16] 0.0, 128
        %805 = vxpose.xlu0.b32.cont [14/16] 0.0, 128
        %806 = vxpose.xlu0.b32.cont [15/16] 0.0, 128
        %807 = vxpose.xlu0.b32.end [16/16] 0.0, 128
        %v808 = vpop.trf.xlu0
        %v809 = vpop.trf.xlu0
        %v810 = vpop.trf.xlu0
        %v811 = vpop.trf.xlu0
        %v812 = vpop.trf.xlu0
        %v813 = vpop.trf.xlu0
        %v814 = vpop.trf.xlu0
        %v815 = vpop.trf.xlu0
        %v816 = vpop.trf.xlu0
        %v817 = vpop.trf.xlu0
        %v818 = vpop.trf.xlu0
        %v819 = vpop.trf.xlu0
        %v820 = vpop.trf.xlu0
        %v821 = vpop.trf.xlu0
        %v822 = vpop.trf.xlu0
        %v823 = vpop.trf.xlu0
        %824 = vxpose.xlu0.b32.start [1/16] %v753, 128
        %825 = vxpose.xlu0.b32.cont [2/16] 0.0, 128
        %826 = vxpose.xlu0.b32.cont [3/16] 0.0, 128
        %827 = vxpose.xlu0.b32.cont [4/16] 0.0, 128
        %828 = vxpose.xlu0.b32.cont [5/16] 0.0, 128
        %829 = vxpose.xlu0.b32.cont [6/16] 0.0, 128
        %830 = vxpose.xlu0.b32.cont [7/16] 0.0, 128
        %831 = vxpose.xlu0.b32.cont [8/16] 0.0, 128
        %832 = vxpose.xlu0.b32.cont [9/16] 0.0, 128
        %833 = vxpose.xlu0.b32.cont [10/16] 0.0, 128
        %834 = vxpose.xlu0.b32.cont [11/16] 0.0, 128
        %835 = vxpose.xlu0.b32.cont [12/16] 0.0, 128
        %836 = vxpose.xlu0.b32.cont [13/16] 0.0, 128
        %837 = vxpose.xlu0.b32.cont [14/16] 0.0, 128
        %838 = vxpose.xlu0.b32.cont [15/16] 0.0, 128
        %839 = vxpose.xlu0.b32.end [16/16] 0.0, 128
        %v840 = vpop.trf.xlu0
        %v841 = vpop.trf.xlu0
        %v842 = vpop.trf.xlu0
        %v843 = vpop.trf.xlu0
        %v844 = vpop.trf.xlu0
        %v845 = vpop.trf.xlu0
        %v846 = vpop.trf.xlu0
        %v847 = vpop.trf.xlu0
        %v848 = vpop.trf.xlu0
        %v849 = vpop.trf.xlu0
        %v850 = vpop.trf.xlu0
        %v851 = vpop.trf.xlu0
        %v852 = vpop.trf.xlu0
        %v853 = vpop.trf.xlu0
        %v854 = vpop.trf.xlu0
        %v855 = vpop.trf.xlu0
        %856 = vxpose.xlu0.b32.start [1/16] %v755, 128
        %857 = vxpose.xlu0.b32.cont [2/16] 0.0, 128
        %858 = vxpose.xlu0.b32.cont [3/16] 0.0, 128
        %859 = vxpose.xlu0.b32.cont [4/16] 0.0, 128
        %860 = vxpose.xlu0.b32.cont [5/16] 0.0, 128
        %861 = vxpose.xlu0.b32.cont [6/16] 0.0, 128
        %862 = vxpose.xlu0.b32.cont [7/16] 0.0, 128
        %863 = vxpose.xlu0.b32.cont [8/16] 0.0, 128
        %864 = vxpose.xlu0.b32.cont [9/16] 0.0, 128
        %865 = vxpose.xlu0.b32.cont [10/16] 0.0, 128
        %866 = vxpose.xlu0.b32.cont [11/16] 0.0, 128
        %867 = vxpose.xlu0.b32.cont [12/16] 0.0, 128
        %868 = vxpose.xlu0.b32.cont [13/16] 0.0, 128
        %869 = vxpose.xlu0.b32.cont [14/16] 0.0, 128
        %870 = vxpose.xlu0.b32.cont [15/16] 0.0, 128
        %871 = vxpose.xlu0.b32.end [16/16] 0.0, 128
        %v872 = vpop.trf.xlu0
        %v873 = vpop.trf.xlu0
        %v874 = vpop.trf.xlu0
        %v875 = vpop.trf.xlu0
        %v876 = vpop.trf.xlu0
        %v877 = vpop.trf.xlu0
        %v878 = vpop.trf.xlu0
        %v879 = vpop.trf.xlu0
        %v880 = vpop.trf.xlu0
        %v881 = vpop.trf.xlu0
        %v882 = vpop.trf.xlu0
        %v883 = vpop.trf.xlu0
        %v884 = vpop.trf.xlu0
        %v885 = vpop.trf.xlu0
        %v886 = vpop.trf.xlu0
        %v887 = vpop.trf.xlu0
        %v889 = vsel %vm400, %v776, 0
        %v892 = vsel %vm400, %v744, 0
        %894 = vmatprep.subr.mxu0 0.0
        %895 = vmatpush1.xpose.msra.mxu0 0.0
        %896 = vmatprep.subr.mxu0 0.0
        %897 = vmatpush1.xpose.msra.mxu0 0.0
        %898 = vmatprep.subr.mxu0 0.0
        %899 = vmatpush1.xpose.msra.mxu0 0.0
        %900 = vmatprep.subr.mxu0 0.0
        %901 = vmatpush1.xpose.msra.mxu0 0.0
        %902 = vmatprep.subr.mxu0 0.0
        %903 = vmatpush1.xpose.msra.mxu0 0.0
        %904 = vmatprep.subr.mxu0 0.0
        %905 = vmatpush1.xpose.msra.mxu0 0.0
        %906 = vmatprep.subr.mxu0 0.0
        %907 = vmatpush1.xpose.msra.mxu0 0.0
        %908 = vmatprep.subr.mxu0 0.0
        %909 = vmatpush1.xpose.msra.mxu0 0.0
        %910 = vmatprep.subr.mxu0 0.0
        %911 = vmatpush1.xpose.msra.mxu0 0.0
        %912 = vmatprep.subr.mxu0 0.0
        %913 = vmatpush1.xpose.msra.mxu0 0.0
        %914 = vmatprep.subr.mxu0 0.0
        %915 = vmatpush1.xpose.msra.mxu0 0.0
        %916 = vmatprep.subr.mxu0 0.0
        %917 = vmatpush1.xpose.msra.mxu0 0.0
        %918 = vmatprep.subr.mxu0 0.0
        %919 = vmatpush1.xpose.msra.mxu0 0.0
        %920 = vmatprep.subr.mxu0 0.0
        %921 = vmatpush1.xpose.msra.mxu0 0.0
        %922 = vmatprep.subr.mxu0 0.0
        %923 = vmatpush1.xpose.msra.mxu0 0.0
        %924 = vmatprep.subr.mxu0 0.0
        %925 = vmatpush1.xpose.msra.mxu0 %v892
        %926 = vmatprep.subr.mxu0 0.0
        %927 = vmatpush2.xpose.msra.mxu0 0.0
        %928 = vmatprep.subr.mxu0 0.0
        %929 = vmatpush2.xpose.msra.mxu0 0.0
        %930 = vmatprep.subr.mxu0 0.0
        %931 = vmatpush2.xpose.msra.mxu0 0.0
        %932 = vmatprep.subr.mxu0 0.0
        %933 = vmatpush2.xpose.msra.mxu0 0.0
        %934 = vmatprep.subr.mxu0 0.0
        %935 = vmatpush2.xpose.msra.mxu0 0.0
        %936 = vmatprep.subr.mxu0 0.0
        %937 = vmatpush2.xpose.msra.mxu0 0.0
        %938 = vmatprep.subr.mxu0 0.0
        %939 = vmatpush2.xpose.msra.mxu0 0.0
        %940 = vmatprep.subr.mxu0 0.0
        %941 = vmatpush2.xpose.msra.mxu0 0.0
        %942 = vmatprep.subr.mxu0 0.0
        %943 = vmatpush2.xpose.msra.mxu0 0.0
        %944 = vmatprep.subr.mxu0 0.0
        %945 = vmatpush2.xpose.msra.mxu0 0.0
        %946 = vmatprep.subr.mxu0 0.0
        %947 = vmatpush2.xpose.msra.mxu0 0.0
        %948 = vmatprep.subr.mxu0 0.0
        %949 = vmatpush2.xpose.msra.mxu0 0.0
        %950 = vmatprep.subr.mxu0 0.0
        %951 = vmatpush2.xpose.msra.mxu0 0.0
        %952 = vmatprep.subr.mxu0 0.0
        %953 = vmatpush2.xpose.msra.mxu0 0.0
        %954 = vmatprep.subr.mxu0 0.0
        %955 = vmatpush2.xpose.msra.mxu0 0.0
        %956 = vmatprep.subr.mxu0 0.0
        %957 = vmatpush2.xpose.msra.mxu0 0.0
        %958 = vmatprep.mubr.f32.mxu0 0.0
        %959 = vmatmul.mubr.f32.gmra.mxu0 %v889
        %v960 = vpop.f32.mrf.mxu0
        %v961 = vadd.f32 0.0, %v960
        %v962 = vpop.f32.mrf.mxu0
        %963 = vdwg.mxu0
        %v965 = vsel %vm400, %v808, 0
        %v968 = vsel %vm400, %v745, 0
        %970 = vmatprep.subr.mxu0 0.0
        %971 = vmatpush1.xpose.msra.mxu0 0.0
        %972 = vmatprep.subr.mxu0 0.0
        %973 = vmatpush1.xpose.msra.mxu0 0.0
        %974 = vmatprep.subr.mxu0 0.0
        %975 = vmatpush1.xpose.msra.mxu0 0.0
        %976 = vmatprep.subr.mxu0 0.0
        %977 = vmatpush1.xpose.msra.mxu0 0.0
        %978 = vmatprep.subr.mxu0 0.0
        %979 = vmatpush1.xpose.msra.mxu0 0.0
        %980 = vmatprep.subr.mxu0 0.0
        %981 = vmatpush1.xpose.msra.mxu0 0.0
        %982 = vmatprep.subr.mxu0 0.0
        %983 = vmatpush1.xpose.msra.mxu0 0.0
        %984 = vmatprep.subr.mxu0 0.0
        %985 = vmatpush1.xpose.msra.mxu0 0.0
        %986 = vmatprep.subr.mxu0 0.0
        %987 = vmatpush1.xpose.msra.mxu0 0.0
        %988 = vmatprep.subr.mxu0 0.0
        %989 = vmatpush1.xpose.msra.mxu0 0.0
        %990 = vmatprep.subr.mxu0 0.0
        %991 = vmatpush1.xpose.msra.mxu0 0.0
        %992 = vmatprep.subr.mxu0 0.0
        %993 = vmatpush1.xpose.msra.mxu0 0.0
        %994 = vmatprep.subr.mxu0 0.0
        %995 = vmatpush1.xpose.msra.mxu0 0.0
        %996 = vmatprep.subr.mxu0 0.0
        %997 = vmatpush1.xpose.msra.mxu0 0.0
        %998 = vmatprep.subr.mxu0 0.0
        %999 = vmatpush1.xpose.msra.mxu0 0.0
        %1000 = vmatprep.subr.mxu0 0.0
        %1001 = vmatpush1.xpose.msra.mxu0 %v968
        %1002 = vmatprep.subr.mxu0 0.0
        %1003 = vmatpush2.xpose.msra.mxu0 0.0
        %1004 = vmatprep.subr.mxu0 0.0
        %1005 = vmatpush2.xpose.msra.mxu0 0.0
        %1006 = vmatprep.subr.mxu0 0.0
        %1007 = vmatpush2.xpose.msra.mxu0 0.0
        %1008 = vmatprep.subr.mxu0 0.0
        %1009 = vmatpush2.xpose.msra.mxu0 0.0
        %1010 = vmatprep.subr.mxu0 0.0
        %1011 = vmatpush2.xpose.msra.mxu0 0.0
        %1012 = vmatprep.subr.mxu0 0.0
        %1013 = vmatpush2.xpose.msra.mxu0 0.0
        %1014 = vmatprep.subr.mxu0 0.0
        %1015 = vmatpush2.xpose.msra.mxu0 0.0
        %1016 = vmatprep.subr.mxu0 0.0
        %1017 = vmatpush2.xpose.msra.mxu0 0.0
        %1018 = vmatprep.subr.mxu0 0.0
        %1019 = vmatpush2.xpose.msra.mxu0 0.0
        %1020 = vmatprep.subr.mxu0 0.0
        %1021 = vmatpush2.xpose.msra.mxu0 0.0
        %1022 = vmatprep.subr.mxu0 0.0
        %1023 = vmatpush2.xpose.msra.mxu0 0.0
        %1024 = vmatprep.subr.mxu0 0.0
        %1025 = vmatpush2.xpose.msra.mxu0 0.0
        %1026 = vmatprep.subr.mxu0 0.0
        %1027 = vmatpush2.xpose.msra.mxu0 0.0
        %1028 = vmatprep.subr.mxu0 0.0
        %1029 = vmatpush2.xpose.msra.mxu0 0.0
        %1030 = vmatprep.subr.mxu0 0.0
        %1031 = vmatpush2.xpose.msra.mxu0 0.0
        %1032 = vmatprep.subr.mxu0 0.0
        %1033 = vmatpush2.xpose.msra.mxu0 0.0
        %1034 = vmatprep.mubr.f32.mxu0 0.0
        %1035 = vmatmul.mubr.f32.gmra.mxu0 %v965
        %v1036 = vpop.f32.mrf.mxu0
        %v1037 = vadd.f32 0.0, %v1036
        %v1038 = vpop.f32.mrf.mxu0
        %1039 = vdwg.mxu0
        %v1041 = vsel %vm400, %v840, 0
        %v1044 = vsel %vm400, %v746, 0
        %1046 = vmatprep.subr.mxu0 0.0
        %1047 = vmatpush1.xpose.msra.mxu0 0.0
        %1048 = vmatprep.subr.mxu0 0.0
        %1049 = vmatpush1.xpose.msra.mxu0 0.0
        %1050 = vmatprep.subr.mxu0 0.0
        %1051 = vmatpush1.xpose.msra.mxu0 0.0
        %1052 = vmatprep.subr.mxu0 0.0
        %1053 = vmatpush1.xpose.msra.mxu0 0.0
        %1054 = vmatprep.subr.mxu0 0.0
        %1055 = vmatpush1.xpose.msra.mxu0 0.0
        %1056 = vmatprep.subr.mxu0 0.0
        %1057 = vmatpush1.xpose.msra.mxu0 0.0
        %1058 = vmatprep.subr.mxu0 0.0
        %1059 = vmatpush1.xpose.msra.mxu0 0.0
        %1060 = vmatprep.subr.mxu0 0.0
        %1061 = vmatpush1.xpose.msra.mxu0 0.0
        %1062 = vmatprep.subr.mxu0 0.0
        %1063 = vmatpush1.xpose.msra.mxu0 0.0
        %1064 = vmatprep.subr.mxu0 0.0
        %1065 = vmatpush1.xpose.msra.mxu0 0.0
        %1066 = vmatprep.subr.mxu0 0.0
        %1067 = vmatpush1.xpose.msra.mxu0 0.0
        %1068 = vmatprep.subr.mxu0 0.0
        %1069 = vmatpush1.xpose.msra.mxu0 0.0
        %1070 = vmatprep.subr.mxu0 0.0
        %1071 = vmatpush1.xpose.msra.mxu0 0.0
        %1072 = vmatprep.subr.mxu0 0.0
        %1073 = vmatpush1.xpose.msra.mxu0 0.0
        %1074 = vmatprep.subr.mxu0 0.0
        %1075 = vmatpush1.xpose.msra.mxu0 0.0
        %1076 = vmatprep.subr.mxu0 0.0
        %1077 = vmatpush1.xpose.msra.mxu0 %v1044
        %1078 = vmatprep.subr.mxu0 0.0
        %1079 = vmatpush2.xpose.msra.mxu0 0.0
        %1080 = vmatprep.subr.mxu0 0.0
        %1081 = vmatpush2.xpose.msra.mxu0 0.0
        %1082 = vmatprep.subr.mxu0 0.0
        %1083 = vmatpush2.xpose.msra.mxu0 0.0
        %1084 = vmatprep.subr.mxu0 0.0
        %1085 = vmatpush2.xpose.msra.mxu0 0.0
        %1086 = vmatprep.subr.mxu0 0.0
        %1087 = vmatpush2.xpose.msra.mxu0 0.0
        %1088 = vmatprep.subr.mxu0 0.0
        %1089 = vmatpush2.xpose.msra.mxu0 0.0
        %1090 = vmatprep.subr.mxu0 0.0
        %1091 = vmatpush2.xpose.msra.mxu0 0.0
        %1092 = vmatprep.subr.mxu0 0.0
        %1093 = vmatpush2.xpose.msra.mxu0 0.0
        %1094 = vmatprep.subr.mxu0 0.0
        %1095 = vmatpush2.xpose.msra.mxu0 0.0
        %1096 = vmatprep.subr.mxu0 0.0
        %1097 = vmatpush2.xpose.msra.mxu0 0.0
        %1098 = vmatprep.subr.mxu0 0.0
        %1099 = vmatpush2.xpose.msra.mxu0 0.0
        %1100 = vmatprep.subr.mxu0 0.0
        %1101 = vmatpush2.xpose.msra.mxu0 0.0
        %1102 = vmatprep.subr.mxu0 0.0
        %1103 = vmatpush2.xpose.msra.mxu0 0.0
        %1104 = vmatprep.subr.mxu0 0.0
        %1105 = vmatpush2.xpose.msra.mxu0 0.0
        %1106 = vmatprep.subr.mxu0 0.0
        %1107 = vmatpush2.xpose.msra.mxu0 0.0
        %1108 = vmatprep.subr.mxu0 0.0
        %1109 = vmatpush2.xpose.msra.mxu0 0.0
        %1110 = vmatprep.mubr.f32.mxu0 0.0
        %1111 = vmatmul.mubr.f32.gmra.mxu0 %v1041
        %v1112 = vpop.f32.mrf.mxu0
        %v1113 = vadd.f32 0.0, %v1112
        %v1114 = vpop.f32.mrf.mxu0
        %1115 = vdwg.mxu0
        %v1117 = vsel %vm400, %v872, 0
        %v1120 = vsel %vm400, %v747, 0
        %1122 = vmatprep.subr.mxu0 0.0
        %1123 = vmatpush1.xpose.msra.mxu0 0.0
        %1124 = vmatprep.subr.mxu0 0.0
        %1125 = vmatpush1.xpose.msra.mxu0 0.0
        %1126 = vmatprep.subr.mxu0 0.0
        %1127 = vmatpush1.xpose.msra.mxu0 0.0
        %1128 = vmatprep.subr.mxu0 0.0
        %1129 = vmatpush1.xpose.msra.mxu0 0.0
        %1130 = vmatprep.subr.mxu0 0.0
        %1131 = vmatpush1.xpose.msra.mxu0 0.0
        %1132 = vmatprep.subr.mxu0 0.0
        %1133 = vmatpush1.xpose.msra.mxu0 0.0
        %1134 = vmatprep.subr.mxu0 0.0
        %1135 = vmatpush1.xpose.msra.mxu0 0.0
        %1136 = vmatprep.subr.mxu0 0.0
        %1137 = vmatpush1.xpose.msra.mxu0 0.0
        %1138 = vmatprep.subr.mxu0 0.0
        %1139 = vmatpush1.xpose.msra.mxu0 0.0
        %1140 = vmatprep.subr.mxu0 0.0
        %1141 = vmatpush1.xpose.msra.mxu0 0.0
        %1142 = vmatprep.subr.mxu0 0.0
        %1143 = vmatpush1.xpose.msra.mxu0 0.0
        %1144 = vmatprep.subr.mxu0 0.0
        %1145 = vmatpush1.xpose.msra.mxu0 0.0
        %1146 = vmatprep.subr.mxu0 0.0
        %1147 = vmatpush1.xpose.msra.mxu0 0.0
        %1148 = vmatprep.subr.mxu0 0.0
        %1149 = vmatpush1.xpose.msra.mxu0 0.0
        %1150 = vmatprep.subr.mxu0 0.0
        %1151 = vmatpush1.xpose.msra.mxu0 0.0
        %1152 = vmatprep.subr.mxu0 0.0
        %1153 = vmatpush1.xpose.msra.mxu0 %v1120
        %1154 = vmatprep.subr.mxu0 0.0
        %1155 = vmatpush2.xpose.msra.mxu0 0.0
        %1156 = vmatprep.subr.mxu0 0.0
        %1157 = vmatpush2.xpose.msra.mxu0 0.0
        %1158 = vmatprep.subr.mxu0 0.0
        %1159 = vmatpush2.xpose.msra.mxu0 0.0
        %1160 = vmatprep.subr.mxu0 0.0
        %1161 = vmatpush2.xpose.msra.mxu0 0.0
        %1162 = vmatprep.subr.mxu0 0.0
        %1163 = vmatpush2.xpose.msra.mxu0 0.0
        %1164 = vmatprep.subr.mxu0 0.0
        %1165 = vmatpush2.xpose.msra.mxu0 0.0
        %1166 = vmatprep.subr.mxu0 0.0
        %1167 = vmatpush2.xpose.msra.mxu0 0.0
        %1168 = vmatprep.subr.mxu0 0.0
        %1169 = vmatpush2.xpose.msra.mxu0 0.0
        %1170 = vmatprep.subr.mxu0 0.0
        %1171 = vmatpush2.xpose.msra.mxu0 0.0
        %1172 = vmatprep.subr.mxu0 0.0
        %1173 = vmatpush2.xpose.msra.mxu0 0.0
        %1174 = vmatprep.subr.mxu0 0.0
        %1175 = vmatpush2.xpose.msra.mxu0 0.0
        %1176 = vmatprep.subr.mxu0 0.0
        %1177 = vmatpush2.xpose.msra.mxu0 0.0
        %1178 = vmatprep.subr.mxu0 0.0
        %1179 = vmatpush2.xpose.msra.mxu0 0.0
        %1180 = vmatprep.subr.mxu0 0.0
        %1181 = vmatpush2.xpose.msra.mxu0 0.0
        %1182 = vmatprep.subr.mxu0 0.0
        %1183 = vmatpush2.xpose.msra.mxu0 0.0
        %1184 = vmatprep.subr.mxu0 0.0
        %1185 = vmatpush2.xpose.msra.mxu0 0.0
        %1186 = vmatprep.mubr.f32.mxu0 0.0
        %1187 = vmatmul.mubr.f32.gmra.mxu0 %v1117
        %v1188 = vpop.f32.mrf.mxu0
        %v1189 = vadd.f32 0.0, %v1188
        %v1190 = vpop.f32.mrf.mxu0
        %1191 = vdwg.mxu0
        %1192 = vxpose.xlu0.b32.start [1/16] %v961, 128
        %1193 = vxpose.xlu0.b32.cont [2/16] 0.0, 128
        %1194 = vxpose.xlu0.b32.cont [3/16] 0.0, 128
        %1195 = vxpose.xlu0.b32.cont [4/16] 0.0, 128
        %1196 = vxpose.xlu0.b32.cont [5/16] 0.0, 128
        %1197 = vxpose.xlu0.b32.cont [6/16] 0.0, 128
        %1198 = vxpose.xlu0.b32.cont [7/16] 0.0, 128
        %1199 = vxpose.xlu0.b32.cont [8/16] 0.0, 128
        %1200 = vxpose.xlu0.b32.cont [9/16] 0.0, 128
        %1201 = vxpose.xlu0.b32.cont [10/16] 0.0, 128
        %1202 = vxpose.xlu0.b32.cont [11/16] 0.0, 128
        %1203 = vxpose.xlu0.b32.cont [12/16] 0.0, 128
        %1204 = vxpose.xlu0.b32.cont [13/16] 0.0, 128
        %1205 = vxpose.xlu0.b32.cont [14/16] 0.0, 128
        %1206 = vxpose.xlu0.b32.cont [15/16] 0.0, 128
        %1207 = vxpose.xlu0.b32.end [16/16] 0.0, 128
        %v1208 = vpop.trf.xlu0
        %v1209 = vpop.trf.xlu0
        %v1210 = vpop.trf.xlu0
        %v1211 = vpop.trf.xlu0
        %v1212 = vpop.trf.xlu0
        %v1213 = vpop.trf.xlu0
        %v1214 = vpop.trf.xlu0
        %v1215 = vpop.trf.xlu0
        %v1216 = vpop.trf.xlu0
        %v1217 = vpop.trf.xlu0
        %v1218 = vpop.trf.xlu0
        %v1219 = vpop.trf.xlu0
        %v1220 = vpop.trf.xlu0
        %v1221 = vpop.trf.xlu0
        %v1222 = vpop.trf.xlu0
        %v1223 = vpop.trf.xlu0
        %1224 = vxpose.xlu0.b32.start [1/16] %v1037, 128
        %1225 = vxpose.xlu0.b32.cont [2/16] 0.0, 128
        %1226 = vxpose.xlu0.b32.cont [3/16] 0.0, 128
        %1227 = vxpose.xlu0.b32.cont [4/16] 0.0, 128
        %1228 = vxpose.xlu0.b32.cont [5/16] 0.0, 128
        %1229 = vxpose.xlu0.b32.cont [6/16] 0.0, 128
        %1230 = vxpose.xlu0.b32.cont [7/16] 0.0, 128
        %1231 = vxpose.xlu0.b32.cont [8/16] 0.0, 128
        %1232 = vxpose.xlu0.b32.cont [9/16] 0.0, 128
        %1233 = vxpose.xlu0.b32.cont [10/16] 0.0, 128
        %1234 = vxpose.xlu0.b32.cont [11/16] 0.0, 128
        %1235 = vxpose.xlu0.b32.cont [12/16] 0.0, 128
        %1236 = vxpose.xlu0.b32.cont [13/16] 0.0, 128
        %1237 = vxpose.xlu0.b32.cont [14/16] 0.0, 128
        %1238 = vxpose.xlu0.b32.cont [15/16] 0.0, 128
        %1239 = vxpose.xlu0.b32.end [16/16] 0.0, 128
        %v1240 = vpop.trf.xlu0
        %v1241 = vpop.trf.xlu0
        %v1242 = vpop.trf.xlu0
        %v1243 = vpop.trf.xlu0
        %v1244 = vpop.trf.xlu0
        %v1245 = vpop.trf.xlu0
        %v1246 = vpop.trf.xlu0
        %v1247 = vpop.trf.xlu0
        %v1248 = vpop.trf.xlu0
        %v1249 = vpop.trf.xlu0
        %v1250 = vpop.trf.xlu0
        %v1251 = vpop.trf.xlu0
        %v1252 = vpop.trf.xlu0
        %v1253 = vpop.trf.xlu0
        %v1254 = vpop.trf.xlu0
        %v1255 = vpop.trf.xlu0
        %1256 = vxpose.xlu0.b32.start [1/16] %v1113, 128
        %1257 = vxpose.xlu0.b32.cont [2/16] 0.0, 128
        %1258 = vxpose.xlu0.b32.cont [3/16] 0.0, 128
        %1259 = vxpose.xlu0.b32.cont [4/16] 0.0, 128
        %1260 = vxpose.xlu0.b32.cont [5/16] 0.0, 128
        %1261 = vxpose.xlu0.b32.cont [6/16] 0.0, 128
        %1262 = vxpose.xlu0.b32.cont [7/16] 0.0, 128
        %1263 = vxpose.xlu0.b32.cont [8/16] 0.0, 128
        %1264 = vxpose.xlu0.b32.cont [9/16] 0.0, 128
        %1265 = vxpose.xlu0.b32.cont [10/16] 0.0, 128
        %1266 = vxpose.xlu0.b32.cont [11/16] 0.0, 128
        %1267 = vxpose.xlu0.b32.cont [12/16] 0.0, 128
        %1268 = vxpose.xlu0.b32.cont [13/16] 0.0, 128
        %1269 = vxpose.xlu0.b32.cont [14/16] 0.0, 128
        %1270 = vxpose.xlu0.b32.cont [15/16] 0.0, 128
        %1271 = vxpose.xlu0.b32.end [16/16] 0.0, 128
        %v1272 = vpop.trf.xlu0
        %v1273 = vpop.trf.xlu0
        %v1274 = vpop.trf.xlu0
        %v1275 = vpop.trf.xlu0
        %v1276 = vpop.trf.xlu0
        %v1277 = vpop.trf.xlu0
        %v1278 = vpop.trf.xlu0
        %v1279 = vpop.trf.xlu0
        %v1280 = vpop.trf.xlu0
        %v1281 = vpop.trf.xlu0
        %v1282 = vpop.trf.xlu0
        %v1283 = vpop.trf.xlu0
        %v1284 = vpop.trf.xlu0
        %v1285 = vpop.trf.xlu0
        %v1286 = vpop.trf.xlu0
        %v1287 = vpop.trf.xlu0
        %1288 = vxpose.xlu0.b32.start [1/16] %v1189, 128
        %1289 = vxpose.xlu0.b32.cont [2/16] 0.0, 128
        %1290 = vxpose.xlu0.b32.cont [3/16] 0.0, 128
        %1291 = vxpose.xlu0.b32.cont [4/16] 0.0, 128
        %1292 = vxpose.xlu0.b32.cont [5/16] 0.0, 128
        %1293 = vxpose.xlu0.b32.cont [6/16] 0.0, 128
        %1294 = vxpose.xlu0.b32.cont [7/16] 0.0, 128
        %1295 = vxpose.xlu0.b32.cont [8/16] 0.0, 128
        %1296 = vxpose.xlu0.b32.cont [9/16] 0.0, 128
        %1297 = vxpose.xlu0.b32.cont [10/16] 0.0, 128
        %1298 = vxpose.xlu0.b32.cont [11/16] 0.0, 128
        %1299 = vxpose.xlu0.b32.cont [12/16] 0.0, 128
        %1300 = vxpose.xlu0.b32.cont [13/16] 0.0, 128
        %1301 = vxpose.xlu0.b32.cont [14/16] 0.0, 128
        %1302 = vxpose.xlu0.b32.cont [15/16] 0.0, 128
        %1303 = vxpose.xlu0.b32.end [16/16] 0.0, 128
        %v1304 = vpop.trf.xlu0
        %v1305 = vpop.trf.xlu0
        %v1306 = vpop.trf.xlu0
        %v1307 = vpop.trf.xlu0
        %v1308 = vpop.trf.xlu0
        %v1309 = vpop.trf.xlu0
        %v1310 = vpop.trf.xlu0
        %v1311 = vpop.trf.xlu0
        %v1312 = vpop.trf.xlu0
        %v1313 = vpop.trf.xlu0
        %v1314 = vpop.trf.xlu0
        %v1315 = vpop.trf.xlu0
        %v1316 = vpop.trf.xlu0
        %v1317 = vpop.trf.xlu0
        %v1318 = vpop.trf.xlu0
        %v1319 = vpop.trf.xlu0
        %v1320 = vcombine.low %v1208, %v1272
        %v1321 = vcombine.high %v1208, %v1272
        %v1323 = vunpack.c.l.s4 1983009808
        %v1324 = vunpack.c.0.s8 %v1323
        %v1325 = vlaneseq
        %v1326 = vshrl.u32 %v1325, 7
        %v1327 = vsub.s32 %v1324, %v1326
        %v1328 = vrot.slane %v1320, %v1327
        %v1330 = vunpack.c.l.s4 1983009808
        %v1331 = vunpack.c.0.s8 %v1330
        %v1332 = vlaneseq
        %v1333 = vshrl.u32 %v1332, 7
        %v1334 = vsub.s32 %v1331, %v1333
        %v1335 = vrot.slane %v1321, %v1334
        %v1336 = vcombine.low %v1240, %v1304
        %v1337 = vcombine.high %v1240, %v1304
        %v1339 = vunpack.c.l.s4 1983009808
        %v1340 = vunpack.c.0.s8 %v1339
        %v1341 = vlaneseq
        %v1342 = vshrl.u32 %v1341, 7
        %v1343 = vsub.s32 %v1340, %v1342
        %v1344 = vrot.slane %v1336, %v1343
        %v1346 = vunpack.c.l.s4 1983009808
        %v1347 = vunpack.c.0.s8 %v1346
        %v1348 = vlaneseq
        %v1349 = vshrl.u32 %v1348, 7
        %v1350 = vsub.s32 %v1347, %v1349
        %v1351 = vrot.slane %v1337, %v1350
        %v1352 = vcombine.low %v1328, %v1344
        %v1353 = vcombine.high %v1328, %v1344
        %v1355 = vunpack.c.l.s4 1934713408
        %v1356 = vunpack.c.0.s8 %v1355
        %v1357 = vlaneseq
        %v1358 = vshrl.u32 %v1357, 7
        %v1359 = vsub.s32 %v1356, %v1358
        %v1360 = vrot.slane %v1352, %v1359
        %v1362 = vunpack.c.l.s4 1934713408
        %v1363 = vunpack.c.0.s8 %v1362
        %v1364 = vlaneseq
        %v1365 = vshrl.u32 %v1364, 7
        %v1366 = vsub.s32 %v1363, %v1365
        %v1367 = vrot.slane %v1353, %v1366
        %v1368 = vcombine.low %v1335, %v1351
        %v1369 = vcombine.high %v1335, %v1351
        %v1371 = vunpack.c.l.s4 1934713408
        %v1372 = vunpack.c.0.s8 %v1371
        %v1373 = vlaneseq
        %v1374 = vshrl.u32 %v1373, 7
        %v1375 = vsub.s32 %v1372, %v1374
        %v1376 = vrot.slane %v1368, %v1375
        %v1378 = vunpack.c.l.s4 1934713408
        %v1379 = vunpack.c.0.s8 %v1378
        %v1380 = vlaneseq
        %v1381 = vshrl.u32 %v1380, 7
        %v1382 = vsub.s32 %v1379, %v1381
        %v1383 = vrot.slane %v1369, %v1382
        %v1384 = vcombine.high %v1360, 0.0
        %v1385 = vcombine.high %v1367, 0.0
        %v1386 = vcombine.high %v1376, 0.0
        %v1387 = vcombine.high %v1383, 0.0
        %v1388 = vcombine.low %v1360, %v1367
        %v1390 = vunpack.c.l.s4 1983009808
        %v1391 = vunpack.c.0.s8 %v1390
        %v1392 = vlaneseq
        %v1393 = vshrl.u32 %v1392, 7
        %v1394 = vsub.s32 %v1391, %v1393
        %v1395 = vrot.slane %v1388, %v1394
        %v1396 = vcombine.low %v1384, %v1385
        %v1398 = vunpack.c.l.s4 1983009808
        %v1399 = vunpack.c.0.s8 %v1398
        %v1400 = vlaneseq
        %v1401 = vshrl.u32 %v1400, 7
        %v1402 = vsub.s32 %v1399, %v1401
        %v1403 = vrot.slane %v1396, %v1402
        %v1404 = vcombine.low %v1376, %v1383
        %v1406 = vunpack.c.l.s4 1983009808
        %v1407 = vunpack.c.0.s8 %v1406
        %v1408 = vlaneseq
        %v1409 = vshrl.u32 %v1408, 7
        %v1410 = vsub.s32 %v1407, %v1409
        %v1411 = vrot.slane %v1404, %v1410
        %v1412 = vcombine.low %v1386, %v1387
        %v1414 = vunpack.c.l.s4 1983009808
        %v1415 = vunpack.c.0.s8 %v1414
        %v1416 = vlaneseq
        %v1417 = vshrl.u32 %v1416, 7
        %v1418 = vsub.s32 %v1415, %v1417
        %v1419 = vrot.slane %v1412, %v1418
        %v1420 = vcombine.low %v1395, %v1403
        %v1421 = vcombine.high %v1395, %v1403
        %v1423 = vunpack.c.l.s4 1934713408
        %v1424 = vunpack.c.0.s8 %v1423
        %v1425 = vlaneseq
        %v1426 = vshrl.u32 %v1425, 7
        %v1427 = vsub.s32 %v1424, %v1426
        %v1428 = vrot.slane %v1420, %v1427
        %v1430 = vunpack.c.l.s4 1934713408
        %v1431 = vunpack.c.0.s8 %v1430
        %v1432 = vlaneseq
        %v1433 = vshrl.u32 %v1432, 7
        %v1434 = vsub.s32 %v1431, %v1433
        %v1435 = vrot.slane %v1421, %v1434
        %v1436 = vcombine.low %v1411, %v1419
        %v1437 = vcombine.high %v1411, %v1419
        %v1439 = vunpack.c.l.s4 1934713408
        %v1440 = vunpack.c.0.s8 %v1439
        %v1441 = vlaneseq
        %v1442 = vshrl.u32 %v1441, 7
        %v1443 = vsub.s32 %v1440, %v1442
        %v1444 = vrot.slane %v1436, %v1443
        %v1446 = vunpack.c.l.s4 1934713408
        %v1447 = vunpack.c.0.s8 %v1446
        %v1448 = vlaneseq
        %v1449 = vshrl.u32 %v1448, 7
        %v1450 = vsub.s32 %v1447, %v1449
        %v1451 = vrot.slane %v1437, %v1450
        %v1452 = vcombine.low %v1428, %v1444
        %v1453 = vcombine.high %v1428, %v1444
        %v1454 = vcombine.low %v1435, %v1451
        %v1455 = vcombine.high %v1435, %v1451
        %1457 = vrot.lane.b32.xlu0 %v1453, 8
        %v1458 = vpop.permute.xlu0 %1457
        %1461 = vrot.lane.b32.xlu0 %v1454, 16
        %v1462 = vpop.permute.xlu0 %1461
        %1465 = vrot.lane.b32.xlu0 %v1455, 24
        %v1466 = vpop.permute.xlu0 %1465
        %v1468 = vsel %vm400, %v1452, %v1458
        %vm1469 = vcmask 130048
        %v1470 = vsel %vm1469, %v1468, %v1462
        %vm1471 = vcmask 195584
        %v1472 = vsel %vm1471, %v1470, %v1466
        %1473 = vst.msk [vmem:[%s173] sm:$0xff] %vm179, %v1472
        %s1474 = sand.u32 %s75, 1
        %s1475 = scalar_lea.sflag [#allocation4], %s1474
        %s1476 = sand.u32 %s75, 1
        %s1477 = smul.addr %s1476, 8
        %s1478 = scalar_lea.vmem [#allocation7], %s1477
        // Predicated region
        $region37: #{tpu_custom_call.1} parent=27 // pred_check
          %p1479 = pneg %p85
        $region38: #{tpu_custom_call.1} parent=27 // pred_check_branch
          %1481 = sbr.rel (%p1479) target = $region40
        $region39: #{tpu_custom_call.1} parent=27 // pred_region
          %s1483 = ssub.s32 128, 128
          %1484 = vsyncadd %s1475, %s1483
          %s1485 = smul.addr %s20, 128
          %s1486 = scalar_lea.hbm %s2, %s1485
          %s1488 = sshll.u32 %s1478, 4
          %s1489 = int_to_ptr.vmem [resolvable:$true] %s1488
          %1491 = dma.vmem_to_hbm [thread:$0]  %s1489, 128, %s1486, %s1475
        $region40: #{tpu_custom_call.1} parent=27 // pred_fallthru
          _
      $region28: #{tpu_custom_call.1} parent=5 // pred_fallthru
        _
      %p1492 = scmp.le.s32.totalorder 2, %s15
      // Predicated region
      $region41: #{tpu_custom_call.1} parent=5 // pred_check
        %p1493 = pneg %p1492
      $region42: #{tpu_custom_call.1} parent=5 // pred_check_branch
        %1495 = sbr.rel (%p1493) target = $region44
      $region43: #{tpu_custom_call.1} parent=5 // pred_region
        %s1496 = ssub.s32 %s15, 2
        // Predicated region
        $region45: #{tpu_custom_call.1} parent=43 // pred_check
          %p1497 = pneg %p91
        $region46: #{tpu_custom_call.1} parent=43 // pred_check_branch
          %1499 = sbr.rel (%p1497) target = $region48
        $region47: #{tpu_custom_call.1} parent=43 // pred_region
          %s1500 = sand.u32 %s76, 1
          %s1501 = scalar_lea.sflag [#allocation4], %s1500
          %s1502 = sand.u32 %s76, 1
          %s1503 = smul.addr %s1502, 8
          %s1504 = scalar_lea.vmem [#allocation7], %s1503
          %1505 = dma.done %s1501, 128
        $region48: #{tpu_custom_call.1} parent=43 // pred_fallthru
          _
      $region44: #{tpu_custom_call.1} parent=5 // pred_fallthru
        _
    $region6: #{tpu_custom_call.1} parent=1 // loop_footer
      %s19 = sadd.s32 1, %s15
    $region7: #{tpu_custom_call.1} parent=1 // loop_footer_branch
      %14 = sbr.rel target = $region3
    $region8: #{tpu_custom_call.1} parent=1 // loop_exit
      _
    %1506 = vsyncpa [#allocation3], 1
    %s1507 = scalar_lea.sflag [#allocation3], 1
    %1508 = vsyncpa %s1507, 1
    %1509 = vsyncpa [#allocation6], 1
    %1510 = vsyncpa [#allocation4], 1
    %s1511 = scalar_lea.sflag [#allocation4], 1
    %1512 = vsyncpa %s1511, 1

</llo_original>
